<compile_context>
chip_gen: v5e
topology: v5e:2x2
jax: 0.10.0
libtpu: 0.0.40
codegen_flags: <defaults>
</compile_context>

<pallas_src>
import functools

import jax
import jax.numpy as jnp
from jax import lax
from jax.experimental import pallas as pl
from jax.experimental.pallas import tpu as pltpu

BN_EPS = 1e-5
LEAKY_SLOPE = 0.1
HIDDEN_SIZES = [256, 128, 64, 32]
LANE = 128  # TPU lane width; every fused block half is zero-padded to this many columns


def _round_up(n, m):
    return ((n + m - 1) // m) * m


def _leaky_relu(h):
    return jnp.where(h >= 0, h, LEAKY_SLOPE * h)


# --------------------------------------------------------------------------- kernel
def _mlp_kernel(
    x_ref,
    w0_ref, b0_ref,
    w1_ref, b1_ref,
    w2_ref, b2_ref,
    w3_ref, b3_ref,
    wo_ref, bo_ref,
    out_ref,
):
    f32 = jnp.float32

    # Input layer (eval-mode BN folded into W/b) + LeakyReLU. Dropout == identity in eval.
    h = jnp.dot(x_ref[...], w0_ref[...], preferred_element_type=f32) + b0_ref[...]
    h = _leaky_relu(h)

    # Residual blocks: one fused MXU dot per block over [W_folded | W_skip]; both halves
    # are zero-padded to 128 columns, so the split below is lane-aligned (pure VPU add,
    # no cross-lane relayout), and padded activation columns stay exactly zero.
    for w_ref, b_ref in ((w1_ref, b1_ref), (w2_ref, b2_ref), (w3_ref, b3_ref)):
        z = jnp.dot(h, w_ref[...], preferred_element_type=f32) + b_ref[...]
        h = _leaky_relu(z[:, :LANE]) + z[:, LANE:]

    # Output layer computed transposed: (8,128) @ (tm,128)^T -> (8,tm); row 0 holds the
    # real logits with the batch dimension on lanes -> lane-dense unmasked stores.
    zo = lax.dot_general(wo_ref[...], h, (((1,), (1,)), ((), ())),
                         preferred_element_type=f32)
    logits = zo[0:1, :] + bo_ref[...]
    out_ref[...] = jax.nn.sigmoid(logits)[None].astype(out_ref.dtype)


# --------------------------------------------------------------------------- param prep
def fold_and_fuse_params(params):
    """Fold eval-mode BN into the Linears, fuse + lane-pad block main/skip weights (f32)."""
    (w0, b0, bn0,
     w1, b1, bn1, s1,
     w2, b2, bn2, s2,
     w3, b3, bn3, s3,
     wo, bo) = params

    f32 = jnp.float32

    def fold(w, b, bn):
        gamma, beta, mean, var = bn[0:1, :], bn[1:2, :], bn[2:3, :], bn[3:4, :]
        scale = gamma * lax.rsqrt(var + BN_EPS)          # (1, H)
        return w * scale, (b - mean) * scale + beta      # (in, H), (1, H)

    def pad_to(a, rows, cols):
        return jnp.pad(a, ((0, rows - a.shape[0]), (0, cols - a.shape[1])))

    w0f, b0f = fold(w0, b0, bn0)
    prepared = [w0f.astype(f32), b0f.astype(f32)]

    for w, b, bn, s in ((w1, b1, bn1, s1), (w2, b2, bn2, s2), (w3, b3, bn3, s3)):
        wf, bf = fold(w, b, bn)
        k_pad = _round_up(w.shape[0], LANE)  # contraction dim of the incoming activation
        w_cat = jnp.concatenate(
            [pad_to(wf, k_pad, LANE), pad_to(s, k_pad, LANE)], axis=1)    # (k_pad, 256)
        b_cat = jnp.concatenate(
            [pad_to(bf, 1, LANE), jnp.zeros((1, LANE), f32)], axis=1)     # (1, 256)
        prepared += [w_cat.astype(f32), b_cat.astype(f32)]

    # Output weights as a zero-padded (8, 128) row block (row 0 = w_out^T).
    wo_blk = pad_to(wo.reshape(1, -1), 8, LANE).astype(f32)
    prepared += [wo_blk, bo.reshape(1, 1).astype(f32)]
    return tuple(prepared)


# --------------------------------------------------------------------------- wrapper
def _tensorcores_per_chip():
    """2 on dual-TensorCore chips (v7x-class), else 1. Defaults to 1 on any doubt."""
    try:
        kind = jax.devices()[0].device_kind.lower()
    except Exception:
        return 1
    return 2 if ("v7" in kind or "7x" in kind) else 1


@functools.partial(jax.jit, static_argnames=("tm", "max_tile"))
def improved_diabetes_net_forward(x, prepared_params, tm=None, max_tile=2048):
    """x: (batch, input_size) f32. prepared_params: output of fold_and_fuse_params."""
    batch, feat = x.shape

    # Balanced batch tiles (multiples of 128 rows): never pad to more than one extra tile,
    # cap the tile size, and on dual-TC chips ensure >= 2 grid steps so the "parallel"
    # batch axis actually shards across TensorCores.
    if tm is None:
        min_tiles = max(1, min(_tensorcores_per_chip(), pl.cdiv(batch, LANE)))
        n_tiles = max(min_tiles, pl.cdiv(batch, max_tile))
    else:
        n_tiles = pl.cdiv(batch, _round_up(tm, LANE))
    tm = _round_up(pl.cdiv(batch, n_tiles), LANE)
    padded = n_tiles * tm

    if padded != batch:
        x = jnp.pad(x, ((0, padded - batch), (0, 0)))

    def resident(p):
        # Full array, same block every grid step -> stays VMEM-resident across the grid.
        # TODO(synk): pipeline_mode=pl.Buffered(1) would drop the redundant double buffer
        #             for these constant-index operands; left at default lowering path.
        return pl.BlockSpec(p.shape, lambda i: (0,) * p.ndim)

    out = pl.pallas_call(
        _mlp_kernel,
        out_shape=jax.ShapeDtypeStruct((n_tiles, 1, tm), jnp.float32),
        grid=(n_tiles,),
        in_specs=[pl.BlockSpec((tm, feat), lambda i: (i, 0))]
                 + [resident(p) for p in prepared_params],
        out_specs=pl.BlockSpec((1, 1, tm), lambda i: (i, 0, 0)),
        compiler_params=pltpu.CompilerParams(
            dimension_semantics=("parallel",),
            vmem_limit_bytes=32 * 1024 * 1024,
        ),
    )(x, *prepared_params)

    # Lane-dense (n_tiles, 1, tm) slab -> (batch, 1).
    return out.reshape(padded, 1)[:batch]


# --------------------------------------------------------------------------- params / reference
def init_params(input_size, hidden_sizes=HIDDEN_SIZES, seed=0):
    """Deterministic synthetic parameters (shapes match ImprovedDiabetesNet.__init__)."""
    key = jax.random.PRNGKey(seed)

    def nxt():
        nonlocal key
        key, sub = jax.random.split(key)
        return sub

    def linear(fan_in, fan_out, bias=True):
        scale = 1.0 / jnp.sqrt(jnp.float32(fan_in))
        w = jax.random.uniform(nxt(), (fan_in, fan_out), jnp.float32, -scale, scale)
        if not bias:
            return w, None
        b = jax.random.uniform(nxt(), (1, fan_out), jnp.float32, -scale, scale)
        return w, b

    def batchnorm(h):
        gamma = jax.random.uniform(nxt(), (1, h), jnp.float32, 0.5, 1.5)
        beta = jax.random.uniform(nxt(), (1, h), jnp.float32, -0.5, 0.5)
        mean = jax.random.uniform(nxt(), (1, h), jnp.float32, -0.5, 0.5)
        var = jax.random.uniform(nxt(), (1, h), jnp.float32, 0.5, 1.5)
        return jnp.concatenate([gamma, beta, mean, var], axis=0)  # (4, h)

    params = []
    w0, b0 = linear(input_size, hidden_sizes[0])
    params += [w0, b0, batchnorm(hidden_sizes[0])]
    for i in range(len(hidden_sizes) - 1):
        w, b = linear(hidden_sizes[i], hidden_sizes[i + 1])
        s, _ = linear(hidden_sizes[i], hidden_sizes[i + 1], bias=False)
        params += [w, b, batchnorm(hidden_sizes[i + 1]), s]
    wo, bo = linear(hidden_sizes[-1], 1)
    params += [wo, bo]
    return tuple(params)


def _hdot(a, b):
    return jnp.dot(a, b, precision=lax.Precision.HIGHEST)


def _bn_lrelu_ref(h, bn):
    gamma, beta, mean, var = bn[0:1, :], bn[1:2, :], bn[2:3, :], bn[3:4, :]
    h = (h - mean) * lax.rsqrt(var + BN_EPS) * gamma + beta
    return jnp.where(h >= 0, h, LEAKY_SLOPE * h)


def reference_forward(x, params):
    """Pure-JAX f32 reference with the original (unfolded, unfused) semantics."""
    (w0, b0, bn0,
     w1, b1, bn1, s1,
     w2, b2, bn2, s2,
     w3, b3, bn3, s3,
     wo, bo) = params
    h = _hdot(x, w0) + b0
    h = _bn_lrelu_ref(h, bn0)
    for w, b, bn, s in ((w1, b1, bn1, s1), (w2, b2, bn2, s2), (w3, b3, bn3, s3)):
        idn = h
        h = _hdot(idn, w) + b
        h = _bn_lrelu_ref(h, bn)
        h = h + _hdot(idn, s)
    return jax.nn.sigmoid(_hdot(h, wo) + bo)


# --------------------------------------------------------------------------- self-test
if __name__ == "__main__":
    INPUT_SIZE = 8   # Pima diabetes dataset has 8 features
    BATCH = 37       # odd size -> exercises row padding

    key = jax.random.PRNGKey(0)
    kx1, kx2 = jax.random.split(key)

    params = init_params(INPUT_SIZE, HIDDEN_SIZES, seed=0)
    prepared = fold_and_fuse_params(params)

    # Default tiling: single 128-row tile covering the whole (padded) batch.
    x1 = jax.random.normal(kx1, (BATCH, INPUT_SIZE), jnp.float32)
    ref1 = reference_forward(x1, params)
    out1 = jax.block_until_ready(improved_diabetes_net_forward(x1, prepared))
    assert out1.shape == (BATCH, 1), out1.shape
    err1 = float(jnp.max(jnp.abs(out1 - ref1)))
    assert err1 < 5e-3, err1

    # Explicit small tile: multi-step batch grid + padding path.
    x2 = jax.random.normal(kx2, (300, INPUT_SIZE), jnp.float32)
    ref2 = reference_forward(x2, params)
    out2 = jax.block_until_ready(improved_diabetes_net_forward(x2, prepared, tm=128))
    assert out2.shape == (300, 1), out2.shape
    err2 = float(jnp.max(jnp.abs(out2 - ref2)))
    assert err2 < 5e-3, err2

    print("KERNEL_OK")
</pallas_src>

<mosaic_0001>
module attributes {stable_mosaic.version = 11 : i64} {
  func.func @_mlp_kernel(%arg0: i32, %arg1: memref<128x8xf32, #tpu.memory_space<vmem>>, %arg2: memref<8x256xf32, #tpu.memory_space<vmem>>, %arg3: memref<1x256xf32, #tpu.memory_space<vmem>>, %arg4: memref<256x256xf32, #tpu.memory_space<vmem>>, %arg5: memref<1x256xf32, #tpu.memory_space<vmem>>, %arg6: memref<128x256xf32, #tpu.memory_space<vmem>>, %arg7: memref<1x256xf32, #tpu.memory_space<vmem>>, %arg8: memref<128x256xf32, #tpu.memory_space<vmem>>, %arg9: memref<1x256xf32, #tpu.memory_space<vmem>>, %arg10: memref<8x128xf32, #tpu.memory_space<vmem>>, %arg11: memref<1x1xf32, #tpu.memory_space<vmem>>, %arg12: memref<1x1x128xf32, #tpu.memory_space<vmem>>) attributes {dimension_semantics = [#tpu.dimension_semantics<parallel>], iteration_bounds = array<i64: 1>, scalar_prefetch = 0 : i64, scratch_operands = 0 : i64, tpu.core_type = #tpu.core_type<tc>, window_params = [{transform_indices = @transform_0, window_bounds = array<i64: 128, 8>}, {pipeline_mode = #tpu.pipeline_mode<synchronous>, transform_indices = @transform_1, window_bounds = array<i64: 8, 256>}, {pipeline_mode = #tpu.pipeline_mode<synchronous>, transform_indices = @transform_2, window_bounds = array<i64: 1, 256>}, {pipeline_mode = #tpu.pipeline_mode<synchronous>, transform_indices = @transform_3, window_bounds = array<i64: 256, 256>}, {pipeline_mode = #tpu.pipeline_mode<synchronous>, transform_indices = @transform_4, window_bounds = array<i64: 1, 256>}, {pipeline_mode = #tpu.pipeline_mode<synchronous>, transform_indices = @transform_5, window_bounds = array<i64: 128, 256>}, {pipeline_mode = #tpu.pipeline_mode<synchronous>, transform_indices = @transform_6, window_bounds = array<i64: 1, 256>}, {pipeline_mode = #tpu.pipeline_mode<synchronous>, transform_indices = @transform_7, window_bounds = array<i64: 128, 256>}, {pipeline_mode = #tpu.pipeline_mode<synchronous>, transform_indices = @transform_8, window_bounds = array<i64: 1, 256>}, {pipeline_mode = #tpu.pipeline_mode<synchronous>, transform_indices = @transform_9, window_bounds = array<i64: 8, 128>}, {pipeline_mode = #tpu.pipeline_mode<synchronous>, transform_indices = @transform_10, window_bounds = array<i64: 1, 1>}, {transform_indices = @transform_11, window_bounds = array<i64: 1, 1, 128>}]} {
    %c0 = arith.constant 0 : index
    %c0_0 = arith.constant 0 : index
    %0 = vector.load %arg1[%c0, %c0_0] : memref<128x8xf32, #tpu.memory_space<vmem>>, vector<128x8xf32>
    %c0_1 = arith.constant 0 : index
    %c0_2 = arith.constant 0 : index
    %1 = vector.load %arg2[%c0_1, %c0_2] : memref<8x256xf32, #tpu.memory_space<vmem>>, vector<8x256xf32>
    %cst = arith.constant dense<0.000000e+00> : vector<128x256xf32>
    %2 = tpu.matmul %0, %1, %cst {dimension_numbers = #tpu.dot_dimension_numbers<[1], [0], [0], [1], [0, 0, 1, 1], [], []>} : vector<128x8xf32>, vector<8x256xf32>, vector<128x256xf32> -> vector<128x256xf32>
    %c0_3 = arith.constant 0 : index
    %c0_4 = arith.constant 0 : index
    %3 = vector.load %arg3[%c0_3, %c0_4] : memref<1x256xf32, #tpu.memory_space<vmem>>, vector<1x256xf32>
    %4 = vector.broadcast %3 : vector<1x256xf32> to vector<128x256xf32>
    %5 = arith.addf %2, %4 : vector<128x256xf32>
    %cst_5 = arith.constant 0.000000e+00 : f32
    %6 = vector.broadcast %cst_5 : f32 to vector<128x256xf32>
    %7 = arith.cmpf oge, %5, %6 : vector<128x256xf32>
    %cst_6 = arith.constant 1.000000e-01 : f32
    %8 = vector.broadcast %cst_6 : f32 to vector<128x256xf32>
    %9 = arith.mulf %8, %5 : vector<128x256xf32>
    %10 = arith.select %7, %5, %9 : vector<128x256xi1>, vector<128x256xf32>
    %c0_7 = arith.constant 0 : index
    %c0_8 = arith.constant 0 : index
    %11 = vector.load %arg4[%c0_7, %c0_8] : memref<256x256xf32, #tpu.memory_space<vmem>>, vector<256x256xf32>
    %cst_9 = arith.constant dense<0.000000e+00> : vector<128x256xf32>
    %12 = tpu.matmul %10, %11, %cst_9 {dimension_numbers = #tpu.dot_dimension_numbers<[1], [0], [0], [1], [0, 0, 1, 1], [], []>} : vector<128x256xf32>, vector<256x256xf32>, vector<128x256xf32> -> vector<128x256xf32>
    %c0_10 = arith.constant 0 : index
    %c0_11 = arith.constant 0 : index
    %13 = vector.load %arg5[%c0_10, %c0_11] : memref<1x256xf32, #tpu.memory_space<vmem>>, vector<1x256xf32>
    %14 = vector.broadcast %13 : vector<1x256xf32> to vector<128x256xf32>
    %15 = arith.addf %12, %14 : vector<128x256xf32>
    %16 = vector.extract_strided_slice %15 {offsets = [0, 0], sizes = [128, 128], strides = [1, 1]} : vector<128x256xf32> to vector<128x128xf32>
    %cst_12 = arith.constant 0.000000e+00 : f32
    %17 = vector.broadcast %cst_12 : f32 to vector<128x128xf32>
    %18 = arith.cmpf oge, %16, %17 : vector<128x128xf32>
    %cst_13 = arith.constant 1.000000e-01 : f32
    %19 = vector.broadcast %cst_13 : f32 to vector<128x128xf32>
    %20 = arith.mulf %19, %16 : vector<128x128xf32>
    %21 = arith.select %18, %16, %20 : vector<128x128xi1>, vector<128x128xf32>
    %22 = vector.extract_strided_slice %15 {offsets = [0, 128], sizes = [128, 128], strides = [1, 1]} : vector<128x256xf32> to vector<128x128xf32>
    %23 = arith.addf %21, %22 : vector<128x128xf32>
    %c0_14 = arith.constant 0 : index
    %c0_15 = arith.constant 0 : index
    %24 = vector.load %arg6[%c0_14, %c0_15] : memref<128x256xf32, #tpu.memory_space<vmem>>, vector<128x256xf32>
    %cst_16 = arith.constant dense<0.000000e+00> : vector<128x256xf32>
    %25 = tpu.matmul %23, %24, %cst_16 {dimension_numbers = #tpu.dot_dimension_numbers<[1], [0], [0], [1], [0, 0, 1, 1], [], []>} : vector<128x128xf32>, vector<128x256xf32>, vector<128x256xf32> -> vector<128x256xf32>
    %c0_17 = arith.constant 0 : index
    %c0_18 = arith.constant 0 : index
    %26 = vector.load %arg7[%c0_17, %c0_18] : memref<1x256xf32, #tpu.memory_space<vmem>>, vector<1x256xf32>
    %27 = vector.broadcast %26 : vector<1x256xf32> to vector<128x256xf32>
    %28 = arith.addf %25, %27 : vector<128x256xf32>
    %29 = vector.extract_strided_slice %28 {offsets = [0, 0], sizes = [128, 128], strides = [1, 1]} : vector<128x256xf32> to vector<128x128xf32>
    %cst_19 = arith.constant 0.000000e+00 : f32
    %30 = vector.broadcast %cst_19 : f32 to vector<128x128xf32>
    %31 = arith.cmpf oge, %29, %30 : vector<128x128xf32>
    %cst_20 = arith.constant 1.000000e-01 : f32
    %32 = vector.broadcast %cst_20 : f32 to vector<128x128xf32>
    %33 = arith.mulf %32, %29 : vector<128x128xf32>
    %34 = arith.select %31, %29, %33 : vector<128x128xi1>, vector<128x128xf32>
    %35 = vector.extract_strided_slice %28 {offsets = [0, 128], sizes = [128, 128], strides = [1, 1]} : vector<128x256xf32> to vector<128x128xf32>
    %36 = arith.addf %34, %35 : vector<128x128xf32>
    %c0_21 = arith.constant 0 : index
    %c0_22 = arith.constant 0 : index
    %37 = vector.load %arg8[%c0_21, %c0_22] : memref<128x256xf32, #tpu.memory_space<vmem>>, vector<128x256xf32>
    %cst_23 = arith.constant dense<0.000000e+00> : vector<128x256xf32>
    %38 = tpu.matmul %36, %37, %cst_23 {dimension_numbers = #tpu.dot_dimension_numbers<[1], [0], [0], [1], [0, 0, 1, 1], [], []>} : vector<128x128xf32>, vector<128x256xf32>, vector<128x256xf32> -> vector<128x256xf32>
    %c0_24 = arith.constant 0 : index
    %c0_25 = arith.constant 0 : index
    %39 = vector.load %arg9[%c0_24, %c0_25] : memref<1x256xf32, #tpu.memory_space<vmem>>, vector<1x256xf32>
    %40 = vector.broadcast %39 : vector<1x256xf32> to vector<128x256xf32>
    %41 = arith.addf %38, %40 : vector<128x256xf32>
    %42 = vector.extract_strided_slice %41 {offsets = [0, 0], sizes = [128, 128], strides = [1, 1]} : vector<128x256xf32> to vector<128x128xf32>
    %cst_26 = arith.constant 0.000000e+00 : f32
    %43 = vector.broadcast %cst_26 : f32 to vector<128x128xf32>
    %44 = arith.cmpf oge, %42, %43 : vector<128x128xf32>
    %cst_27 = arith.constant 1.000000e-01 : f32
    %45 = vector.broadcast %cst_27 : f32 to vector<128x128xf32>
    %46 = arith.mulf %45, %42 : vector<128x128xf32>
    %47 = arith.select %44, %42, %46 : vector<128x128xi1>, vector<128x128xf32>
    %48 = vector.extract_strided_slice %41 {offsets = [0, 128], sizes = [128, 128], strides = [1, 1]} : vector<128x256xf32> to vector<128x128xf32>
    %49 = arith.addf %47, %48 : vector<128x128xf32>
    %c0_28 = arith.constant 0 : index
    %c0_29 = arith.constant 0 : index
    %50 = vector.load %arg10[%c0_28, %c0_29] : memref<8x128xf32, #tpu.memory_space<vmem>>, vector<8x128xf32>
    %cst_30 = arith.constant dense<0.000000e+00> : vector<8x128xf32>
    %51 = tpu.matmul %50, %49, %cst_30 {dimension_numbers = #tpu.dot_dimension_numbers<[1], [1], [0], [0], [0, 0, 1, 0], [], []>} : vector<8x128xf32>, vector<128x128xf32>, vector<8x128xf32> -> vector<8x128xf32>
    %52 = vector.extract_strided_slice %51 {offsets = [0, 0], sizes = [1, 128], strides = [1, 1]} : vector<8x128xf32> to vector<1x128xf32>
    %c0_31 = arith.constant 0 : index
    %c0_32 = arith.constant 0 : index
    %53 = vector.load %arg11[%c0_31, %c0_32] : memref<1x1xf32, #tpu.memory_space<vmem>>, vector<1x1xf32>
    %54 = vector.broadcast %53 : vector<1x1xf32> to vector<1x128xf32>
    %55 = arith.addf %52, %54 : vector<1x128xf32>
    %56 = arith.negf %55 : vector<1x128xf32>
    %57 = math.exp %56 : vector<1x128xf32>
    %cst_33 = arith.constant 1.000000e+00 : f32
    %58 = vector.broadcast %cst_33 : f32 to vector<1x128xf32>
    %59 = arith.addf %58, %57 : vector<1x128xf32>
    %60 = arith.divf %58, %59 : vector<1x128xf32>
    %61 = vector.shape_cast %60 : vector<1x128xf32> to vector<1x1x128xf32>
    %c0_34 = arith.constant 0 : index
    %c0_35 = arith.constant 0 : index
    %c0_36 = arith.constant 0 : index
    %62 = vector.load %arg12[%c0_34, %c0_35, %c0_36] : memref<1x1x128xf32, #tpu.memory_space<vmem>>, vector<1x1x128xf32>
    tpu.vector_store %arg12[%c0_34, %c0_35, %c0_36], %61 {strides = array<i32>} : memref<1x1x128xf32, #tpu.memory_space<vmem>>, vector<1x1x128xf32>,
    return
  }
  func.func @transform_0(%arg0: i32) -> (i32, i32) {
    %c0_i32 = arith.constant 0 : i32
    %c0_i32_0 = arith.constant 0 : i32
    return %arg0, %c0_i32 : i32, i32
  }
  func.func @transform_1(%arg0: i32) -> (i32, i32) {
    %c0_i32 = arith.constant 0 : i32
    %c0_i32_0 = arith.constant 0 : i32
    %c0_i32_1 = arith.constant 0 : i32
    return %c0_i32, %c0_i32_0 : i32, i32
  }
  func.func @transform_2(%arg0: i32) -> (i32, i32) {
    %c0_i32 = arith.constant 0 : i32
    %c0_i32_0 = arith.constant 0 : i32
    %c0_i32_1 = arith.constant 0 : i32
    return %c0_i32, %c0_i32_0 : i32, i32
  }
  func.func @transform_3(%arg0: i32) -> (i32, i32) {
    %c0_i32 = arith.constant 0 : i32
    %c0_i32_0 = arith.constant 0 : i32
    %c0_i32_1 = arith.constant 0 : i32
    return %c0_i32, %c0_i32_0 : i32, i32
  }
  func.func @transform_4(%arg0: i32) -> (i32, i32) {
    %c0_i32 = arith.constant 0 : i32
    %c0_i32_0 = arith.constant 0 : i32
    %c0_i32_1 = arith.constant 0 : i32
    return %c0_i32, %c0_i32_0 : i32, i32
  }
  func.func @transform_5(%arg0: i32) -> (i32, i32) {
    %c0_i32 = arith.constant 0 : i32
    %c0_i32_0 = arith.constant 0 : i32
    %c0_i32_1 = arith.constant 0 : i32
    return %c0_i32, %c0_i32_0 : i32, i32
  }
  func.func @transform_6(%arg0: i32) -> (i32, i32) {
    %c0_i32 = arith.constant 0 : i32
    %c0_i32_0 = arith.constant 0 : i32
    %c0_i32_1 = arith.constant 0 : i32
    return %c0_i32, %c0_i32_0 : i32, i32
  }
  func.func @transform_7(%arg0: i32) -> (i32, i32) {
    %c0_i32 = arith.constant 0 : i32
    %c0_i32_0 = arith.constant 0 : i32
    %c0_i32_1 = arith.constant 0 : i32
    return %c0_i32, %c0_i32_0 : i32, i32
  }
  func.func @transform_8(%arg0: i32) -> (i32, i32) {
    %c0_i32 = arith.constant 0 : i32
    %c0_i32_0 = arith.constant 0 : i32
    %c0_i32_1 = arith.constant 0 : i32
    return %c0_i32, %c0_i32_0 : i32, i32
  }
  func.func @transform_9(%arg0: i32) -> (i32, i32) {
    %c0_i32 = arith.constant 0 : i32
    %c0_i32_0 = arith.constant 0 : i32
    %c0_i32_1 = arith.constant 0 : i32
    return %c0_i32, %c0_i32_0 : i32, i32
  }
  func.func @transform_10(%arg0: i32) -> (i32, i32) {
    %c0_i32 = arith.constant 0 : i32
    %c0_i32_0 = arith.constant 0 : i32
    %c0_i32_1 = arith.constant 0 : i32
    return %c0_i32, %c0_i32_0 : i32, i32
  }
  func.func @transform_11(%arg0: i32) -> (i32, i32, i32) {
    %c0_i32 = arith.constant 0 : i32
    %c0_i32_0 = arith.constant 0 : i32
    %c0_i32_1 = arith.constant 0 : i32
    return %arg0, %c0_i32, %c0_i32_0 : i32, i32, i32
  }
}

</mosaic_0001>

<llo_original>
// kernel: improved_diabetes_net_forward.1
$region0: #{improved_diabetes_net_forward.1}
  #allocation0 [shape = 'u32[]', space=smem, size = 0x4, offset = 0x4, fixed_abs, tag = 'smem constant byte address 0x4 - core index']
  #allocation1 [shape = 'u32[72,128]{1,0:T(1,128)}', space=vmem, size = 0x9000, scoped, tag = 'internal scratch']
  #allocation2 [shape = 'f32[1,1]{1,0:T(1,128)S(1)}', space=vmem, size = 0x200, scoped, tag = 'scoped memory for improved_diabetes_net_forward.1']
  %s0 = inlined_call_operand.vmem [shape: f32[128,8], index: 0, kind: input, shape index: {}]
  %s1 = inlined_call_operand.vmem [shape: f32[8,256], index: 1, kind: input, shape index: {}]
  %s2 = inlined_call_operand.vmem [shape: f32[1,256], index: 2, kind: input, shape index: {}]
  %s3 = inlined_call_operand.hbm [shape: f32[256,256], index: 3, kind: input, shape index: {}]
  %s4 = inlined_call_operand.vmem [shape: f32[1,256], index: 4, kind: input, shape index: {}]
  %s5 = inlined_call_operand.hbm [shape: f32[128,256], index: 5, kind: input, shape index: {}]
  %s6 = inlined_call_operand.vmem [shape: f32[1,256], index: 6, kind: input, shape index: {}]
  %s7 = inlined_call_operand.hbm [shape: f32[128,256], index: 7, kind: input, shape index: {}]
  %s8 = inlined_call_operand.vmem [shape: f32[1,256], index: 8, kind: input, shape index: {}]
  %s9 = inlined_call_operand.vmem [shape: f32[8,128], index: 9, kind: input, shape index: {}]
  %s10 = inlined_call_operand.<no memory space> [shape: f32[1,1], index: 10, kind: input, shape index: {}]
  %s11 = inlined_call_operand.vmem [shape: f32[1,1,128], index: 11, kind: output, shape index: {}]
  %s12 = sld [smem:[#allocation0]]
  $region66: #{improved_diabetes_net_forward.1} parent=0
    _
  %s14 = ssub.s32 1, %s12
  %s15 = scalar_select 0, %s14, %s12
  %v16 = vstv %s10
  %17 = vst [vmem:[#allocation2] sm:$0x1] %v16
  $region1: #{improved_diabetes_net_forward.1} parent=0
    #allocation3 [shape = 'u8[262144]{0}', space=vmem, size = 0x40000, scoped, tag = 'input window, operand 3, single buffered']
    #allocation4 [shape = 's32[1]{0}', space=sflag, size = 0x4, scoped, tag = 'scoped memory for improved_diabetes_net_forward.1']
    #allocation5 [shape = 'u8[131072]{0}', space=vmem, size = 0x20000, scoped, tag = 'input window, operand 5, single buffered']
    #allocation6 [shape = 's32[1]{0}', space=sflag, size = 0x4, scoped, tag = 'scoped memory for improved_diabetes_net_forward.1']
    #allocation7 [shape = 'u8[131072]{0}', space=vmem, size = 0x20000, scoped, tag = 'input window, operand 7, single buffered']
    %18 = vsyncpa [#allocation4], 0
    %19 = vsyncpa [#allocation6], 0
    // Predicated region
    $region2: #{improved_diabetes_net_forward.1} parent=1 // pred_check
      _
    $region3: #{improved_diabetes_net_forward.1} parent=1 // pred_check_branch
      %21 = sbr.rel (0) target = $region5
    $region4: #{improved_diabetes_net_forward.1} parent=1 // pred_region
      _
    $region5: #{improved_diabetes_net_forward.1} parent=1 // pred_fallthru
      _
    // Predicated region
    $region6: #{improved_diabetes_net_forward.1} parent=1 // pred_check
      _
    $region7: #{improved_diabetes_net_forward.1} parent=1 // pred_check_branch
      %23 = sbr.rel (0) target = $region9
    $region8: #{improved_diabetes_net_forward.1} parent=1 // pred_region
      _
    $region9: #{improved_diabetes_net_forward.1} parent=1 // pred_fallthru
      _
    // Predicated region
    $region10: #{improved_diabetes_net_forward.1} parent=1 // pred_check
      _
    $region11: #{improved_diabetes_net_forward.1} parent=1 // pred_check_branch
      %25 = sbr.rel (0) target = $region13
    $region12: #{improved_diabetes_net_forward.1} parent=1 // pred_region
      _
    $region13: #{improved_diabetes_net_forward.1} parent=1 // pred_fallthru
      _
    // Predicated region
    $region14: #{improved_diabetes_net_forward.1} parent=1 // pred_check
      _
    $region15: #{improved_diabetes_net_forward.1} parent=1 // pred_check_branch
      %27 = sbr.rel (0) target = $region17
    $region16: #{improved_diabetes_net_forward.1} parent=1 // pred_region
      %29 = vsyncadd [#allocation4], 0
      %s30 = sshll.u32 %s3, 4
      %s31 = int_to_ptr.hbm [resolvable:$true] %s30
      %s32 = sshll.u32 [#allocation3], 4
      %s33 = int_to_ptr.vmem [resolvable:$true] %s32
      %38 = dma.hbm_to_vmem [thread:$0]  %s31, 8192, %s33, [#allocation4], 256, 256, 16
    $region17: #{improved_diabetes_net_forward.1} parent=1 // pred_fallthru
      _
    // Predicated region
    $region18: #{improved_diabetes_net_forward.1} parent=1 // pred_check
      _
    $region19: #{improved_diabetes_net_forward.1} parent=1 // pred_check_branch
      %40 = sbr.rel (0) target = $region21
    $region20: #{improved_diabetes_net_forward.1} parent=1 // pred_region
      _
    $region21: #{improved_diabetes_net_forward.1} parent=1 // pred_fallthru
      _
    // Predicated region
    $region22: #{improved_diabetes_net_forward.1} parent=1 // pred_check
      _
    $region23: #{improved_diabetes_net_forward.1} parent=1 // pred_check_branch
      %42 = sbr.rel (0) target = $region25
    $region24: #{improved_diabetes_net_forward.1} parent=1 // pred_region
      %44 = vsyncadd [#allocation6], 0
      %s45 = sshll.u32 %s5, 4
      %s46 = int_to_ptr.hbm [resolvable:$true] %s45
      %s47 = sshll.u32 [#allocation5], 4
      %s48 = int_to_ptr.vmem [resolvable:$true] %s47
      %53 = dma.hbm_to_vmem [thread:$0]  %s46, 4096, %s48, [#allocation6], 256, 256, 16
    $region25: #{improved_diabetes_net_forward.1} parent=1 // pred_fallthru
      _
    // Predicated region
    $region26: #{improved_diabetes_net_forward.1} parent=1 // pred_check
      _
    $region27: #{improved_diabetes_net_forward.1} parent=1 // pred_check_branch
      %55 = sbr.rel (0) target = $region29
    $region28: #{improved_diabetes_net_forward.1} parent=1 // pred_region
      _
    $region29: #{improved_diabetes_net_forward.1} parent=1 // pred_fallthru
      _
    // Predicated region
    $region30: #{improved_diabetes_net_forward.1} parent=1 // pred_check
      _
    $region31: #{improved_diabetes_net_forward.1} parent=1 // pred_check_branch
      %57 = sbr.rel (0) target = $region33
    $region32: #{improved_diabetes_net_forward.1} parent=1 // pred_region
      %59 = vsyncadd [#allocation6], 0
      %s60 = sshll.u32 %s7, 4
      %s61 = int_to_ptr.hbm [resolvable:$true] %s60
      %s62 = sshll.u32 [#allocation7], 4
      %s63 = int_to_ptr.vmem [resolvable:$true] %s62
      %68 = dma.hbm_to_vmem [thread:$0]  %s61, 4096, %s63, [#allocation6], 256, 256, 16
    $region33: #{improved_diabetes_net_forward.1} parent=1 // pred_fallthru
      _
    // Predicated region
    $region34: #{improved_diabetes_net_forward.1} parent=1 // pred_check
      _
    $region35: #{improved_diabetes_net_forward.1} parent=1 // pred_check_branch
      %70 = sbr.rel (0) target = $region37
    $region36: #{improved_diabetes_net_forward.1} parent=1 // pred_region
      _
    $region37: #{improved_diabetes_net_forward.1} parent=1 // pred_fallthru
      _
    // Predicated region
    $region38: #{improved_diabetes_net_forward.1} parent=1 // pred_check
      _
    $region39: #{improved_diabetes_net_forward.1} parent=1 // pred_check_branch
      %72 = sbr.rel (0) target = $region41
    $region40: #{improved_diabetes_net_forward.1} parent=1 // pred_region
      _
    $region41: #{improved_diabetes_net_forward.1} parent=1 // pred_fallthru
      _
    // Predicated region
    $region42: #{improved_diabetes_net_forward.1} parent=1 // pred_check
      _
    $region43: #{improved_diabetes_net_forward.1} parent=1 // pred_check_branch
      %74 = sbr.rel (0) target = $region45
    $region44: #{improved_diabetes_net_forward.1} parent=1 // pred_region
      _
    $region45: #{improved_diabetes_net_forward.1} parent=1 // pred_fallthru
      _
    // Predicated region
    $region46: #{improved_diabetes_net_forward.1} parent=1 // pred_check
      _
    $region47: #{improved_diabetes_net_forward.1} parent=1 // pred_check_branch
      %76 = sbr.rel (0) target = $region49
    $region48: #{improved_diabetes_net_forward.1} parent=1 // pred_region
      %78 = dma.done [#allocation4], 8192
    $region49: #{improved_diabetes_net_forward.1} parent=1 // pred_fallthru
      _
    // Predicated region
    $region50: #{improved_diabetes_net_forward.1} parent=1 // pred_check
      _
    $region51: #{improved_diabetes_net_forward.1} parent=1 // pred_check_branch
      %80 = sbr.rel (0) target = $region53
    $region52: #{improved_diabetes_net_forward.1} parent=1 // pred_region
      %82 = dma.done [#allocation6], 4096
    $region53: #{improved_diabetes_net_forward.1} parent=1 // pred_fallthru
      _
    // Predicated region
    $region54: #{improved_diabetes_net_forward.1} parent=1 // pred_check
      _
    $region55: #{improved_diabetes_net_forward.1} parent=1 // pred_check_branch
      %84 = sbr.rel (0) target = $region57
    $region56: #{improved_diabetes_net_forward.1} parent=1 // pred_region
      %86 = dma.done [#allocation6], 4096
    $region57: #{improved_diabetes_net_forward.1} parent=1 // pred_fallthru
      _
    %v87 = vld [vmem:[%s0] sm:$0xff]
    %v88 = vld [vmem:[%s0 + $0x8] sm:$0xff]
    %v89 = vld [vmem:[%s0 + $0x10] sm:$0xff]
    %v90 = vld [vmem:[%s0 + $0x18] sm:$0xff]
    %v91 = vld [vmem:[%s0 + $0x20] sm:$0xff]
    %v92 = vld [vmem:[%s0 + $0x28] sm:$0xff]
    %v93 = vld [vmem:[%s0 + $0x30] sm:$0xff]
    %v94 = vld [vmem:[%s0 + $0x38] sm:$0xff]
    %v95 = vld [vmem:[%s0 + $0x40] sm:$0xff]
    %v96 = vld [vmem:[%s0 + $0x48] sm:$0xff]
    %v97 = vld [vmem:[%s0 + $0x50] sm:$0xff]
    %v98 = vld [vmem:[%s0 + $0x58] sm:$0xff]
    %v99 = vld [vmem:[%s0 + $0x60] sm:$0xff]
    %v100 = vld [vmem:[%s0 + $0x68] sm:$0xff]
    %v101 = vld [vmem:[%s0 + $0x70] sm:$0xff]
    %v102 = vld [vmem:[%s0 + $0x78] sm:$0xff]
    %v103 = vld [vmem:[%s1] sm:$0xff]
    %v104 = vld [vmem:[%s1 + $0x8] sm:$0xff]
    %v105 = vld [vmem:[%s2] sm:$0x3]
    %v107 = vperm.slane %v105, 0
    %v108 = vperm.slane %v105, 1
    %vm111 = vcmask 64512
    %v113 = vsel %vm111, %v87, 0
    %v116 = vsel %vm111, %v88, 0
    %v119 = vsel %vm111, %v89, 0
    %v122 = vsel %vm111, %v90, 0
    %v125 = vsel %vm111, %v91, 0
    %v128 = vsel %vm111, %v92, 0
    %v131 = vsel %vm111, %v93, 0
    %v134 = vsel %vm111, %v94, 0
    %v137 = vsel %vm111, %v95, 0
    %v140 = vsel %vm111, %v96, 0
    %v143 = vsel %vm111, %v97, 0
    %v146 = vsel %vm111, %v98, 0
    %v149 = vsel %vm111, %v99, 0
    %v152 = vsel %vm111, %v100, 0
    %v155 = vsel %vm111, %v101, 0
    %v158 = vsel %vm111, %v102, 0
    %160 = vmatpush.msra.mxu0 0.0
    %161 = vmatpush.msra.mxu0 0.0
    %162 = vmatpush.msra.mxu0 0.0
    %163 = vmatpush.msra.mxu0 0.0
    %164 = vmatpush.msra.mxu0 0.0
    %165 = vmatpush.msra.mxu0 0.0
    %166 = vmatpush.msra.mxu0 0.0
    %167 = vmatpush.msra.mxu0 0.0
    %168 = vmatpush.msra.mxu0 0.0
    %169 = vmatpush.msra.mxu0 0.0
    %170 = vmatpush.msra.mxu0 0.0
    %171 = vmatpush.msra.mxu0 0.0
    %172 = vmatpush.msra.mxu0 0.0
    %173 = vmatpush.msra.mxu0 0.0
    %174 = vmatpush.msra.mxu0 0.0
    %175 = vmatpush.msra.mxu0 %v103
    %176 = vmatmul.f32.gmra.mxu0 %v113
    %v177 = vpop.f32.mrf.mxu0
    %v178 = vadd.f32 %v107, %v177
    %179 = vmatmul.f32.gmra.mxu0 %v116
    %v180 = vpop.f32.mrf.mxu0
    %v181 = vadd.f32 %v107, %v180
    %182 = vmatmul.f32.gmra.mxu0 %v119
    %v183 = vpop.f32.mrf.mxu0
    %v184 = vadd.f32 %v107, %v183
    %185 = vmatmul.f32.gmra.mxu0 %v122
    %v186 = vpop.f32.mrf.mxu0
    %v187 = vadd.f32 %v107, %v186
    %188 = vmatmul.f32.gmra.mxu0 %v125
    %v189 = vpop.f32.mrf.mxu0
    %v190 = vadd.f32 %v107, %v189
    %191 = vmatmul.f32.gmra.mxu0 %v128
    %v192 = vpop.f32.mrf.mxu0
    %v193 = vadd.f32 %v107, %v192
    %194 = vmatmul.f32.gmra.mxu0 %v131
    %v195 = vpop.f32.mrf.mxu0
    %v196 = vadd.f32 %v107, %v195
    %197 = vmatmul.f32.gmra.mxu0 %v134
    %v198 = vpop.f32.mrf.mxu0
    %v199 = vadd.f32 %v107, %v198
    %200 = vmatmul.f32.gmra.mxu0 %v137
    %v201 = vpop.f32.mrf.mxu0
    %v202 = vadd.f32 %v107, %v201
    %203 = vmatmul.f32.gmra.mxu0 %v140
    %v204 = vpop.f32.mrf.mxu0
    %v205 = vadd.f32 %v107, %v204
    %206 = vmatmul.f32.gmra.mxu0 %v143
    %v207 = vpop.f32.mrf.mxu0
    %v208 = vadd.f32 %v107, %v207
    %209 = vmatmul.f32.gmra.mxu0 %v146
    %v210 = vpop.f32.mrf.mxu0
    %v211 = vadd.f32 %v107, %v210
    %212 = vmatmul.f32.gmra.mxu0 %v149
    %v213 = vpop.f32.mrf.mxu0
    %v214 = vadd.f32 %v107, %v213
    %215 = vmatmul.f32.gmra.mxu0 %v152
    %v216 = vpop.f32.mrf.mxu0
    %v217 = vadd.f32 %v107, %v216
    %218 = vmatmul.f32.gmra.mxu0 %v155
    %v219 = vpop.f32.mrf.mxu0
    %v220 = vadd.f32 %v107, %v219
    %221 = vmatmul.f32.gmra.mxu0 %v158
    %v222 = vpop.f32.mrf.mxu0
    %v223 = vadd.f32 %v107, %v222
    %224 = vdwg.mxu0
    %225 = vmatpush.msra.mxu0 0.0
    %226 = vmatpush.msra.mxu0 0.0
    %227 = vmatpush.msra.mxu0 0.0
    %228 = vmatpush.msra.mxu0 0.0
    %229 = vmatpush.msra.mxu0 0.0
    %230 = vmatpush.msra.mxu0 0.0
    %231 = vmatpush.msra.mxu0 0.0
    %232 = vmatpush.msra.mxu0 0.0
    %233 = vmatpush.msra.mxu0 0.0
    %234 = vmatpush.msra.mxu0 0.0
    %235 = vmatpush.msra.mxu0 0.0
    %236 = vmatpush.msra.mxu0 0.0
    %237 = vmatpush.msra.mxu0 0.0
    %238 = vmatpush.msra.mxu0 0.0
    %239 = vmatpush.msra.mxu0 0.0
    %240 = vmatpush.msra.mxu0 %v104
    %241 = vmatmul.f32.gmra.mxu0 %v113
    %v242 = vpop.f32.mrf.mxu0
    %v243 = vadd.f32 %v108, %v242
    %244 = vmatmul.f32.gmra.mxu0 %v116
    %v245 = vpop.f32.mrf.mxu0
    %v246 = vadd.f32 %v108, %v245
    %247 = vmatmul.f32.gmra.mxu0 %v119
    %v248 = vpop.f32.mrf.mxu0
    %v249 = vadd.f32 %v108, %v248
    %250 = vmatmul.f32.gmra.mxu0 %v122
    %v251 = vpop.f32.mrf.mxu0
    %v252 = vadd.f32 %v108, %v251
    %253 = vmatmul.f32.gmra.mxu0 %v125
    %v254 = vpop.f32.mrf.mxu0
    %v255 = vadd.f32 %v108, %v254
    %256 = vmatmul.f32.gmra.mxu0 %v128
    %v257 = vpop.f32.mrf.mxu0
    %v258 = vadd.f32 %v108, %v257
    %259 = vmatmul.f32.gmra.mxu0 %v131
    %v260 = vpop.f32.mrf.mxu0
    %v261 = vadd.f32 %v108, %v260
    %262 = vmatmul.f32.gmra.mxu0 %v134
    %v263 = vpop.f32.mrf.mxu0
    %v264 = vadd.f32 %v108, %v263
    %265 = vmatmul.f32.gmra.mxu0 %v137
    %v266 = vpop.f32.mrf.mxu0
    %v267 = vadd.f32 %v108, %v266
    %268 = vmatmul.f32.gmra.mxu0 %v140
    %v269 = vpop.f32.mrf.mxu0
    %v270 = vadd.f32 %v108, %v269
    %271 = vmatmul.f32.gmra.mxu0 %v143
    %v272 = vpop.f32.mrf.mxu0
    %v273 = vadd.f32 %v108, %v272
    %274 = vmatmul.f32.gmra.mxu0 %v146
    %v275 = vpop.f32.mrf.mxu0
    %v276 = vadd.f32 %v108, %v275
    %277 = vmatmul.f32.gmra.mxu0 %v149
    %v278 = vpop.f32.mrf.mxu0
    %v279 = vadd.f32 %v108, %v278
    %280 = vmatmul.f32.gmra.mxu0 %v152
    %v281 = vpop.f32.mrf.mxu0
    %v282 = vadd.f32 %v108, %v281
    %283 = vmatmul.f32.gmra.mxu0 %v155
    %v284 = vpop.f32.mrf.mxu0
    %v285 = vadd.f32 %v108, %v284
    %286 = vmatmul.f32.gmra.mxu0 %v158
    %v287 = vpop.f32.mrf.mxu0
    %v288 = vadd.f32 %v108, %v287
    %289 = vdwg.mxu0
    %vm290 = vcmp.ge.f32.partialorder %v178, 0.0
    %vm291 = vcmp.ge.f32.partialorder %v243, 0.0
    %vm292 = vcmp.ge.f32.partialorder %v181, 0.0
    %vm293 = vcmp.ge.f32.partialorder %v246, 0.0
    %vm294 = vcmp.ge.f32.partialorder %v184, 0.0
    %vm295 = vcmp.ge.f32.partialorder %v249, 0.0
    %vm296 = vcmp.ge.f32.partialorder %v187, 0.0
    %vm297 = vcmp.ge.f32.partialorder %v252, 0.0
    %vm298 = vcmp.ge.f32.partialorder %v190, 0.0
    %vm299 = vcmp.ge.f32.partialorder %v255, 0.0
    %vm300 = vcmp.ge.f32.partialorder %v193, 0.0
    %vm301 = vcmp.ge.f32.partialorder %v258, 0.0
    %vm302 = vcmp.ge.f32.partialorder %v196, 0.0
    %vm303 = vcmp.ge.f32.partialorder %v261, 0.0
    %vm304 = vcmp.ge.f32.partialorder %v199, 0.0
    %vm305 = vcmp.ge.f32.partialorder %v264, 0.0
    %vm306 = vcmp.ge.f32.partialorder %v202, 0.0
    %vm307 = vcmp.ge.f32.partialorder %v267, 0.0
    %vm308 = vcmp.ge.f32.partialorder %v205, 0.0
    %vm309 = vcmp.ge.f32.partialorder %v270, 0.0
    %vm310 = vcmp.ge.f32.partialorder %v208, 0.0
    %vm311 = vcmp.ge.f32.partialorder %v273, 0.0
    %vm312 = vcmp.ge.f32.partialorder %v211, 0.0
    %vm313 = vcmp.ge.f32.partialorder %v276, 0.0
    %vm314 = vcmp.ge.f32.partialorder %v214, 0.0
    %vm315 = vcmp.ge.f32.partialorder %v279, 0.0
    %vm316 = vcmp.ge.f32.partialorder %v217, 0.0
    %vm317 = vcmp.ge.f32.partialorder %v282, 0.0
    %vm318 = vcmp.ge.f32.partialorder %v220, 0.0
    %vm319 = vcmp.ge.f32.partialorder %v285, 0.0
    %vm320 = vcmp.ge.f32.partialorder %v223, 0.0
    %vm321 = vcmp.ge.f32.partialorder %v288, 0.0
    %v322 = vmul.f32 %v178, 0.1
    %v323 = vmul.f32 %v243, 0.1
    %v324 = vmul.f32 %v181, 0.1
    %v325 = vmul.f32 %v246, 0.1
    %v326 = vmul.f32 %v184, 0.1
    %v327 = vmul.f32 %v249, 0.1
    %v328 = vmul.f32 %v187, 0.1
    %v329 = vmul.f32 %v252, 0.1
    %v330 = vmul.f32 %v190, 0.1
    %v331 = vmul.f32 %v255, 0.1
    %v332 = vmul.f32 %v193, 0.1
    %v333 = vmul.f32 %v258, 0.1
    %v334 = vmul.f32 %v196, 0.1
    %v335 = vmul.f32 %v261, 0.1
    %v336 = vmul.f32 %v199, 0.1
    %v337 = vmul.f32 %v264, 0.1
    %v338 = vmul.f32 %v202, 0.1
    %v339 = vmul.f32 %v267, 0.1
    %v340 = vmul.f32 %v205, 0.1
    %v341 = vmul.f32 %v270, 0.1
    %v342 = vmul.f32 %v208, 0.1
    %v343 = vmul.f32 %v273, 0.1
    %v344 = vmul.f32 %v211, 0.1
    %v345 = vmul.f32 %v276, 0.1
    %v346 = vmul.f32 %v214, 0.1
    %v347 = vmul.f32 %v279, 0.1
    %v348 = vmul.f32 %v217, 0.1
    %v349 = vmul.f32 %v282, 0.1
    %v350 = vmul.f32 %v220, 0.1
    %v351 = vmul.f32 %v285, 0.1
    %v352 = vmul.f32 %v223, 0.1
    %v353 = vmul.f32 %v288, 0.1
    %v354 = vsel %vm290, %v178, %v322
    %v355 = vsel %vm291, %v243, %v323
    %v356 = vsel %vm292, %v181, %v324
    %v357 = vsel %vm293, %v246, %v325
    %v358 = vsel %vm294, %v184, %v326
    %v359 = vsel %vm295, %v249, %v327
    %v360 = vsel %vm296, %v187, %v328
    %v361 = vsel %vm297, %v252, %v329
    %v362 = vsel %vm298, %v190, %v330
    %v363 = vsel %vm299, %v255, %v331
    %v364 = vsel %vm300, %v193, %v332
    %v365 = vsel %vm301, %v258, %v333
    %v366 = vsel %vm302, %v196, %v334
    %v367 = vsel %vm303, %v261, %v335
    %v368 = vsel %vm304, %v199, %v336
    %v369 = vsel %vm305, %v264, %v337
    %v370 = vsel %vm306, %v202, %v338
    %v371 = vsel %vm307, %v267, %v339
    %v372 = vsel %vm308, %v205, %v340
    %v373 = vsel %vm309, %v270, %v341
    %v374 = vsel %vm310, %v208, %v342
    %v375 = vsel %vm311, %v273, %v343
    %v376 = vsel %vm312, %v211, %v344
    %v377 = vsel %vm313, %v276, %v345
    %v378 = vsel %vm314, %v214, %v346
    %v379 = vsel %vm315, %v279, %v347
    %v380 = vsel %vm316, %v217, %v348
    %v381 = vsel %vm317, %v282, %v349
    %v382 = vsel %vm318, %v220, %v350
    %v383 = vsel %vm319, %v285, %v351
    %v384 = vsel %vm320, %v223, %v352
    %v385 = vsel %vm321, %v288, %v353
    %v386 = vld [vmem:[#allocation3] sm:$0xff]
    %v387 = vld [vmem:[#allocation3 + $0x8] sm:$0xff]
    %v388 = vld [vmem:[#allocation3 + $0x10] sm:$0xff]
    %v389 = vld [vmem:[#allocation3 + $0x18] sm:$0xff]
    %v390 = vld [vmem:[#allocation3 + $0x20] sm:$0xff]
    %v391 = vld [vmem:[#allocation3 + $0x28] sm:$0xff]
    %v392 = vld [vmem:[#allocation3 + $0x30] sm:$0xff]
    %v393 = vld [vmem:[#allocation3 + $0x38] sm:$0xff]
    %v394 = vld [vmem:[#allocation3 + $0x40] sm:$0xff]
    %v395 = vld [vmem:[#allocation3 + $0x48] sm:$0xff]
    %v396 = vld [vmem:[#allocation3 + $0x50] sm:$0xff]
    %v397 = vld [vmem:[#allocation3 + $0x58] sm:$0xff]
    %v398 = vld [vmem:[#allocation3 + $0x60] sm:$0xff]
    %v399 = vld [vmem:[#allocation3 + $0x68] sm:$0xff]
    %v400 = vld [vmem:[#allocation3 + $0x70] sm:$0xff]
    %v401 = vld [vmem:[#allocation3 + $0x78] sm:$0xff]
    %v402 = vld [vmem:[#allocation3 + $0x80] sm:$0xff]
    %v403 = vld [vmem:[#allocation3 + $0x88] sm:$0xff]
    %v404 = vld [vmem:[#allocation3 + $0x90] sm:$0xff]
    %v405 = vld [vmem:[#allocation3 + $0x98] sm:$0xff]
    %v406 = vld [vmem:[#allocation3 + $0xa0] sm:$0xff]
    %v407 = vld [vmem:[#allocation3 + $0xa8] sm:$0xff]
    %v408 = vld [vmem:[#allocation3 + $0xb0] sm:$0xff]
    %v409 = vld [vmem:[#allocation3 + $0xb8] sm:$0xff]
    %v410 = vld [vmem:[#allocation3 + $0xc0] sm:$0xff]
    %v411 = vld [vmem:[#allocation3 + $0xc8] sm:$0xff]
    %v412 = vld [vmem:[#allocation3 + $0xd0] sm:$0xff]
    %v413 = vld [vmem:[#allocation3 + $0xd8] sm:$0xff]
    %v414 = vld [vmem:[#allocation3 + $0xe0] sm:$0xff]
    %v415 = vld [vmem:[#allocation3 + $0xe8] sm:$0xff]
    %v416 = vld [vmem:[#allocation3 + $0xf0] sm:$0xff]
    %v417 = vld [vmem:[#allocation3 + $0xf8] sm:$0xff]
    %v418 = vld [vmem:[#allocation3 + $0x100] sm:$0xff]
    %v419 = vld [vmem:[#allocation3 + $0x108] sm:$0xff]
    %v420 = vld [vmem:[#allocation3 + $0x110] sm:$0xff]
    %v421 = vld [vmem:[#allocation3 + $0x118] sm:$0xff]
    %v422 = vld [vmem:[#allocation3 + $0x120] sm:$0xff]
    %v423 = vld [vmem:[#allocation3 + $0x128] sm:$0xff]
    %v424 = vld [vmem:[#allocation3 + $0x130] sm:$0xff]
    %v425 = vld [vmem:[#allocation3 + $0x138] sm:$0xff]
    %v426 = vld [vmem:[#allocation3 + $0x140] sm:$0xff]
    %v427 = vld [vmem:[#allocation3 + $0x148] sm:$0xff]
    %v428 = vld [vmem:[#allocation3 + $0x150] sm:$0xff]
    %v429 = vld [vmem:[#allocation3 + $0x158] sm:$0xff]
    %v430 = vld [vmem:[#allocation3 + $0x160] sm:$0xff]
    %v431 = vld [vmem:[#allocation3 + $0x168] sm:$0xff]
    %v432 = vld [vmem:[#allocation3 + $0x170] sm:$0xff]
    %v433 = vld [vmem:[#allocation3 + $0x178] sm:$0xff]
    %v434 = vld [vmem:[#allocation3 + $0x180] sm:$0xff]
    %v435 = vld [vmem:[#allocation3 + $0x188] sm:$0xff]
    %v436 = vld [vmem:[#allocation3 + $0x190] sm:$0xff]
    %v437 = vld [vmem:[#allocation3 + $0x198] sm:$0xff]
    %v438 = vld [vmem:[#allocation3 + $0x1a0] sm:$0xff]
    %v439 = vld [vmem:[#allocation3 + $0x1a8] sm:$0xff]
    %v440 = vld [vmem:[#allocation3 + $0x1b0] sm:$0xff]
    %v441 = vld [vmem:[#allocation3 + $0x1b8] sm:$0xff]
    %v442 = vld [vmem:[#allocation3 + $0x1c0] sm:$0xff]
    %v443 = vld [vmem:[#allocation3 + $0x1c8] sm:$0xff]
    %v444 = vld [vmem:[#allocation3 + $0x1d0] sm:$0xff]
    %v445 = vld [vmem:[#allocation3 + $0x1d8] sm:$0xff]
    %v446 = vld [vmem:[#allocation3 + $0x1e0] sm:$0xff]
    %v447 = vld [vmem:[#allocation3 + $0x1e8] sm:$0xff]
    %v448 = vld [vmem:[#allocation3 + $0x1f0] sm:$0xff]
    %v449 = vld [vmem:[#allocation3 + $0x1f8] sm:$0xff]
    %v450 = vld [vmem:[%s4] sm:$0x3]
    %v452 = vperm.slane %v450, 0
    %v453 = vperm.slane %v450, 1
    %456 = vmatpush.msra.mxu0 %v416
    %457 = vmatpush.msra.mxu0 %v414
    %458 = vmatpush.msra.mxu0 %v412
    %459 = vmatpush.msra.mxu0 %v410
    %460 = vmatpush.msra.mxu0 %v408
    %461 = vmatpush.msra.mxu0 %v406
    %462 = vmatpush.msra.mxu0 %v404
    %463 = vmatpush.msra.mxu0 %v402
    %464 = vmatpush.msra.mxu0 %v400
    %465 = vmatpush.msra.mxu0 %v398
    %466 = vmatpush.msra.mxu0 %v396
    %467 = vmatpush.msra.mxu0 %v394
    %468 = vmatpush.msra.mxu0 %v392
    %469 = vmatpush.msra.mxu0 %v390
    %470 = vmatpush.msra.mxu0 %v388
    %471 = vmatpush.msra.mxu0 %v386
    %472 = vmatmul.f32.gmra.mxu0 %v354
    %v473 = vpop.f32.mrf.mxu0
    %v474 = vadd.f32 %v452, %v473
    %475 = vmatmul.f32.gmra.mxu0 %v356
    %v476 = vpop.f32.mrf.mxu0
    %v477 = vadd.f32 %v452, %v476
    %478 = vmatmul.f32.gmra.mxu0 %v358
    %v479 = vpop.f32.mrf.mxu0
    %v480 = vadd.f32 %v452, %v479
    %481 = vmatmul.f32.gmra.mxu0 %v360
    %v482 = vpop.f32.mrf.mxu0
    %v483 = vadd.f32 %v452, %v482
    %484 = vmatmul.f32.gmra.mxu0 %v362
    %v485 = vpop.f32.mrf.mxu0
    %v486 = vadd.f32 %v452, %v485
    %487 = vmatmul.f32.gmra.mxu0 %v364
    %v488 = vpop.f32.mrf.mxu0
    %v489 = vadd.f32 %v452, %v488
    %490 = vmatmul.f32.gmra.mxu0 %v366
    %v491 = vpop.f32.mrf.mxu0
    %v492 = vadd.f32 %v452, %v491
    %493 = vmatmul.f32.gmra.mxu0 %v368
    %v494 = vpop.f32.mrf.mxu0
    %v495 = vadd.f32 %v452, %v494
    %496 = vmatmul.f32.gmra.mxu0 %v370
    %v497 = vpop.f32.mrf.mxu0
    %v498 = vadd.f32 %v452, %v497
    %499 = vmatmul.f32.gmra.mxu0 %v372
    %v500 = vpop.f32.mrf.mxu0
    %v501 = vadd.f32 %v452, %v500
    %502 = vmatmul.f32.gmra.mxu0 %v374
    %v503 = vpop.f32.mrf.mxu0
    %v504 = vadd.f32 %v452, %v503
    %505 = vmatmul.f32.gmra.mxu0 %v376
    %v506 = vpop.f32.mrf.mxu0
    %v507 = vadd.f32 %v452, %v506
    %508 = vmatmul.f32.gmra.mxu0 %v378
    %v509 = vpop.f32.mrf.mxu0
    %v510 = vadd.f32 %v452, %v509
    %511 = vmatmul.f32.gmra.mxu0 %v380
    %v512 = vpop.f32.mrf.mxu0
    %v513 = vadd.f32 %v452, %v512
    %514 = vmatmul.f32.gmra.mxu0 %v382
    %v515 = vpop.f32.mrf.mxu0
    %v516 = vadd.f32 %v452, %v515
    %517 = vmatmul.f32.gmra.mxu0 %v384
    %v518 = vpop.f32.mrf.mxu0
    %v519 = vadd.f32 %v452, %v518
    %520 = vdwg.mxu0
    %521 = vmatpush.msra.mxu0 %v448
    %522 = vmatpush.msra.mxu0 %v446
    %523 = vmatpush.msra.mxu0 %v444
    %524 = vmatpush.msra.mxu0 %v442
    %525 = vmatpush.msra.mxu0 %v440
    %526 = vmatpush.msra.mxu0 %v438
    %527 = vmatpush.msra.mxu0 %v436
    %528 = vmatpush.msra.mxu0 %v434
    %529 = vmatpush.msra.mxu0 %v432
    %530 = vmatpush.msra.mxu0 %v430
    %531 = vmatpush.msra.mxu0 %v428
    %532 = vmatpush.msra.mxu0 %v426
    %533 = vmatpush.msra.mxu0 %v424
    %534 = vmatpush.msra.mxu0 %v422
    %535 = vmatpush.msra.mxu0 %v420
    %536 = vmatpush.msra.mxu0 %v418
    %537 = vmatmul.f32.gmra.mxu0 %v355
    %v538 = vpop.f32.mrf.mxu0
    %v539 = vadd.f32 %v474, %v538
    %540 = vmatmul.f32.gmra.mxu0 %v357
    %v541 = vpop.f32.mrf.mxu0
    %v542 = vadd.f32 %v477, %v541
    %543 = vmatmul.f32.gmra.mxu0 %v359
    %v544 = vpop.f32.mrf.mxu0
    %v545 = vadd.f32 %v480, %v544
    %546 = vmatmul.f32.gmra.mxu0 %v361
    %v547 = vpop.f32.mrf.mxu0
    %v548 = vadd.f32 %v483, %v547
    %549 = vmatmul.f32.gmra.mxu0 %v363
    %v550 = vpop.f32.mrf.mxu0
    %v551 = vadd.f32 %v486, %v550
    %552 = vmatmul.f32.gmra.mxu0 %v365
    %v553 = vpop.f32.mrf.mxu0
    %v554 = vadd.f32 %v489, %v553
    %555 = vmatmul.f32.gmra.mxu0 %v367
    %v556 = vpop.f32.mrf.mxu0
    %v557 = vadd.f32 %v492, %v556
    %558 = vmatmul.f32.gmra.mxu0 %v369
    %v559 = vpop.f32.mrf.mxu0
    %v560 = vadd.f32 %v495, %v559
    %561 = vmatmul.f32.gmra.mxu0 %v371
    %v562 = vpop.f32.mrf.mxu0
    %v563 = vadd.f32 %v498, %v562
    %564 = vmatmul.f32.gmra.mxu0 %v373
    %v565 = vpop.f32.mrf.mxu0
    %v566 = vadd.f32 %v501, %v565
    %567 = vmatmul.f32.gmra.mxu0 %v375
    %v568 = vpop.f32.mrf.mxu0
    %v569 = vadd.f32 %v504, %v568
    %570 = vmatmul.f32.gmra.mxu0 %v377
    %v571 = vpop.f32.mrf.mxu0
    %v572 = vadd.f32 %v507, %v571
    %573 = vmatmul.f32.gmra.mxu0 %v379
    %v574 = vpop.f32.mrf.mxu0
    %v575 = vadd.f32 %v510, %v574
    %576 = vmatmul.f32.gmra.mxu0 %v381
    %v577 = vpop.f32.mrf.mxu0
    %v578 = vadd.f32 %v513, %v577
    %579 = vmatmul.f32.gmra.mxu0 %v383
    %v580 = vpop.f32.mrf.mxu0
    %v581 = vadd.f32 %v516, %v580
    %582 = vmatmul.f32.gmra.mxu0 %v385
    %v583 = vpop.f32.mrf.mxu0
    %v584 = vadd.f32 %v519, %v583
    %585 = vdwg.mxu0
    %586 = vmatpush.msra.mxu0 %v417
    %587 = vmatpush.msra.mxu0 %v415
    %588 = vmatpush.msra.mxu0 %v413
    %589 = vmatpush.msra.mxu0 %v411
    %590 = vmatpush.msra.mxu0 %v409
    %591 = vmatpush.msra.mxu0 %v407
    %592 = vmatpush.msra.mxu0 %v405
    %593 = vmatpush.msra.mxu0 %v403
    %594 = vmatpush.msra.mxu0 %v401
    %595 = vmatpush.msra.mxu0 %v399
    %596 = vmatpush.msra.mxu0 %v397
    %597 = vmatpush.msra.mxu0 %v395
    %598 = vmatpush.msra.mxu0 %v393
    %599 = vmatpush.msra.mxu0 %v391
    %600 = vmatpush.msra.mxu0 %v389
    %601 = vmatpush.msra.mxu0 %v387
    %602 = vmatmul.f32.gmra.mxu0 %v354
    %v603 = vpop.f32.mrf.mxu0
    %v604 = vadd.f32 %v453, %v603
    %605 = vmatmul.f32.gmra.mxu0 %v356
    %v606 = vpop.f32.mrf.mxu0
    %v607 = vadd.f32 %v453, %v606
    %608 = vmatmul.f32.gmra.mxu0 %v358
    %v609 = vpop.f32.mrf.mxu0
    %v610 = vadd.f32 %v453, %v609
    %611 = vmatmul.f32.gmra.mxu0 %v360
    %v612 = vpop.f32.mrf.mxu0
    %v613 = vadd.f32 %v453, %v612
    %614 = vmatmul.f32.gmra.mxu0 %v362
    %v615 = vpop.f32.mrf.mxu0
    %v616 = vadd.f32 %v453, %v615
    %617 = vmatmul.f32.gmra.mxu0 %v364
    %v618 = vpop.f32.mrf.mxu0
    %v619 = vadd.f32 %v453, %v618
    %620 = vmatmul.f32.gmra.mxu0 %v366
    %v621 = vpop.f32.mrf.mxu0
    %v622 = vadd.f32 %v453, %v621
    %623 = vmatmul.f32.gmra.mxu0 %v368
    %v624 = vpop.f32.mrf.mxu0
    %v625 = vadd.f32 %v453, %v624
    %626 = vmatmul.f32.gmra.mxu0 %v370
    %v627 = vpop.f32.mrf.mxu0
    %v628 = vadd.f32 %v453, %v627
    %629 = vmatmul.f32.gmra.mxu0 %v372
    %v630 = vpop.f32.mrf.mxu0
    %v631 = vadd.f32 %v453, %v630
    %632 = vmatmul.f32.gmra.mxu0 %v374
    %v633 = vpop.f32.mrf.mxu0
    %v634 = vadd.f32 %v453, %v633
    %635 = vmatmul.f32.gmra.mxu0 %v376
    %v636 = vpop.f32.mrf.mxu0
    %v637 = vadd.f32 %v453, %v636
    %638 = vmatmul.f32.gmra.mxu0 %v378
    %v639 = vpop.f32.mrf.mxu0
    %v640 = vadd.f32 %v453, %v639
    %641 = vmatmul.f32.gmra.mxu0 %v380
    %v642 = vpop.f32.mrf.mxu0
    %v643 = vadd.f32 %v453, %v642
    %644 = vmatmul.f32.gmra.mxu0 %v382
    %v645 = vpop.f32.mrf.mxu0
    %v646 = vadd.f32 %v453, %v645
    %647 = vmatmul.f32.gmra.mxu0 %v384
    %v648 = vpop.f32.mrf.mxu0
    %v649 = vadd.f32 %v453, %v648
    %650 = vdwg.mxu0
    %651 = vmatpush.msra.mxu0 %v449
    %652 = vmatpush.msra.mxu0 %v447
    %653 = vmatpush.msra.mxu0 %v445
    %654 = vmatpush.msra.mxu0 %v443
    %655 = vmatpush.msra.mxu0 %v441
    %656 = vmatpush.msra.mxu0 %v439
    %657 = vmatpush.msra.mxu0 %v437
    %658 = vmatpush.msra.mxu0 %v435
    %659 = vmatpush.msra.mxu0 %v433
    %660 = vmatpush.msra.mxu0 %v431
    %661 = vmatpush.msra.mxu0 %v429
    %662 = vmatpush.msra.mxu0 %v427
    %663 = vmatpush.msra.mxu0 %v425
    %664 = vmatpush.msra.mxu0 %v423
    %665 = vmatpush.msra.mxu0 %v421
    %666 = vmatpush.msra.mxu0 %v419
    %667 = vmatmul.f32.gmra.mxu0 %v355
    %v668 = vpop.f32.mrf.mxu0
    %v669 = vadd.f32 %v604, %v668
    %670 = vmatmul.f32.gmra.mxu0 %v357
    %v671 = vpop.f32.mrf.mxu0
    %v672 = vadd.f32 %v607, %v671
    %673 = vmatmul.f32.gmra.mxu0 %v359
    %v674 = vpop.f32.mrf.mxu0
    %v675 = vadd.f32 %v610, %v674
    %676 = vmatmul.f32.gmra.mxu0 %v361
    %v677 = vpop.f32.mrf.mxu0
    %v678 = vadd.f32 %v613, %v677
    %679 = vmatmul.f32.gmra.mxu0 %v363
    %v680 = vpop.f32.mrf.mxu0
    %v681 = vadd.f32 %v616, %v680
    %682 = vmatmul.f32.gmra.mxu0 %v365
    %v683 = vpop.f32.mrf.mxu0
    %v684 = vadd.f32 %v619, %v683
    %685 = vmatmul.f32.gmra.mxu0 %v367
    %v686 = vpop.f32.mrf.mxu0
    %v687 = vadd.f32 %v622, %v686
    %688 = vmatmul.f32.gmra.mxu0 %v369
    %v689 = vpop.f32.mrf.mxu0
    %v690 = vadd.f32 %v625, %v689
    %691 = vmatmul.f32.gmra.mxu0 %v371
    %v692 = vpop.f32.mrf.mxu0
    %v693 = vadd.f32 %v628, %v692
    %694 = vmatmul.f32.gmra.mxu0 %v373
    %v695 = vpop.f32.mrf.mxu0
    %v696 = vadd.f32 %v631, %v695
    %697 = vmatmul.f32.gmra.mxu0 %v375
    %v698 = vpop.f32.mrf.mxu0
    %v699 = vadd.f32 %v634, %v698
    %700 = vmatmul.f32.gmra.mxu0 %v377
    %v701 = vpop.f32.mrf.mxu0
    %v702 = vadd.f32 %v637, %v701
    %703 = vmatmul.f32.gmra.mxu0 %v379
    %v704 = vpop.f32.mrf.mxu0
    %v705 = vadd.f32 %v640, %v704
    %706 = vmatmul.f32.gmra.mxu0 %v381
    %v707 = vpop.f32.mrf.mxu0
    %v708 = vadd.f32 %v643, %v707
    %709 = vmatmul.f32.gmra.mxu0 %v383
    %v710 = vpop.f32.mrf.mxu0
    %v711 = vadd.f32 %v646, %v710
    %712 = vmatmul.f32.gmra.mxu0 %v385
    %v713 = vpop.f32.mrf.mxu0
    %v714 = vadd.f32 %v649, %v713
    %715 = vdwg.mxu0
    %vm716 = vcmp.ge.f32.partialorder %v539, 0.0
    %vm717 = vcmp.ge.f32.partialorder %v542, 0.0
    %vm718 = vcmp.ge.f32.partialorder %v545, 0.0
    %vm719 = vcmp.ge.f32.partialorder %v548, 0.0
    %vm720 = vcmp.ge.f32.partialorder %v551, 0.0
    %vm721 = vcmp.ge.f32.partialorder %v554, 0.0
    %vm722 = vcmp.ge.f32.partialorder %v557, 0.0
    %vm723 = vcmp.ge.f32.partialorder %v560, 0.0
    %vm724 = vcmp.ge.f32.partialorder %v563, 0.0
    %vm725 = vcmp.ge.f32.partialorder %v566, 0.0
    %vm726 = vcmp.ge.f32.partialorder %v569, 0.0
    %vm727 = vcmp.ge.f32.partialorder %v572, 0.0
    %vm728 = vcmp.ge.f32.partialorder %v575, 0.0
    %vm729 = vcmp.ge.f32.partialorder %v578, 0.0
    %vm730 = vcmp.ge.f32.partialorder %v581, 0.0
    %vm731 = vcmp.ge.f32.partialorder %v584, 0.0
    %v732 = vmul.f32 %v539, 0.1
    %v733 = vmul.f32 %v542, 0.1
    %v734 = vmul.f32 %v545, 0.1
    %v735 = vmul.f32 %v548, 0.1
    %v736 = vmul.f32 %v551, 0.1
    %v737 = vmul.f32 %v554, 0.1
    %v738 = vmul.f32 %v557, 0.1
    %v739 = vmul.f32 %v560, 0.1
    %v740 = vmul.f32 %v563, 0.1
    %v741 = vmul.f32 %v566, 0.1
    %v742 = vmul.f32 %v569, 0.1
    %v743 = vmul.f32 %v572, 0.1
    %v744 = vmul.f32 %v575, 0.1
    %v745 = vmul.f32 %v578, 0.1
    %v746 = vmul.f32 %v581, 0.1
    %v747 = vmul.f32 %v584, 0.1
    %v748 = vsel %vm716, %v539, %v732
    %v749 = vsel %vm717, %v542, %v733
    %v750 = vsel %vm718, %v545, %v734
    %v751 = vsel %vm719, %v548, %v735
    %v752 = vsel %vm720, %v551, %v736
    %v753 = vsel %vm721, %v554, %v737
    %v754 = vsel %vm722, %v557, %v738
    %v755 = vsel %vm723, %v560, %v739
    %v756 = vsel %vm724, %v563, %v740
    %v757 = vsel %vm725, %v566, %v741
    %v758 = vsel %vm726, %v569, %v742
    %v759 = vsel %vm727, %v572, %v743
    %v760 = vsel %vm728, %v575, %v744
    %v761 = vsel %vm729, %v578, %v745
    %v762 = vsel %vm730, %v581, %v746
    %v763 = vsel %vm731, %v584, %v747
    %v764 = vadd.f32 %v748, %v669
    %v765 = vadd.f32 %v749, %v672
    %v766 = vadd.f32 %v750, %v675
    %v767 = vadd.f32 %v751, %v678
    %v768 = vadd.f32 %v752, %v681
    %v769 = vadd.f32 %v753, %v684
    %v770 = vadd.f32 %v754, %v687
    %v771 = vadd.f32 %v755, %v690
    %v772 = vadd.f32 %v756, %v693
    %v773 = vadd.f32 %v757, %v696
    %v774 = vadd.f32 %v758, %v699
    %v775 = vadd.f32 %v759, %v702
    %v776 = vadd.f32 %v760, %v705
    %v777 = vadd.f32 %v761, %v708
    %v778 = vadd.f32 %v762, %v711
    %v779 = vadd.f32 %v763, %v714
    %v780 = vld [vmem:[#allocation5] sm:$0xff]
    %v781 = vld [vmem:[#allocation5 + $0x8] sm:$0xff]
    %v782 = vld [vmem:[#allocation5 + $0x10] sm:$0xff]
    %v783 = vld [vmem:[#allocation5 + $0x18] sm:$0xff]
    %v784 = vld [vmem:[#allocation5 + $0x20] sm:$0xff]
    %v785 = vld [vmem:[#allocation5 + $0x28] sm:$0xff]
    %v786 = vld [vmem:[#allocation5 + $0x30] sm:$0xff]
    %v787 = vld [vmem:[#allocation5 + $0x38] sm:$0xff]
    %v788 = vld [vmem:[#allocation5 + $0x40] sm:$0xff]
    %v789 = vld [vmem:[#allocation5 + $0x48] sm:$0xff]
    %v790 = vld [vmem:[#allocation5 + $0x50] sm:$0xff]
    %v791 = vld [vmem:[#allocation5 + $0x58] sm:$0xff]
    %v792 = vld [vmem:[#allocation5 + $0x60] sm:$0xff]
    %v793 = vld [vmem:[#allocation5 + $0x68] sm:$0xff]
    %v794 = vld [vmem:[#allocation5 + $0x70] sm:$0xff]
    %v795 = vld [vmem:[#allocation5 + $0x78] sm:$0xff]
    %v796 = vld [vmem:[#allocation5 + $0x80] sm:$0xff]
    %v797 = vld [vmem:[#allocation5 + $0x88] sm:$0xff]
    %v798 = vld [vmem:[#allocation5 + $0x90] sm:$0xff]
    %v799 = vld [vmem:[#allocation5 + $0x98] sm:$0xff]
    %v800 = vld [vmem:[#allocation5 + $0xa0] sm:$0xff]
    %v801 = vld [vmem:[#allocation5 + $0xa8] sm:$0xff]
    %v802 = vld [vmem:[#allocation5 + $0xb0] sm:$0xff]
    %v803 = vld [vmem:[#allocation5 + $0xb8] sm:$0xff]
    %v804 = vld [vmem:[#allocation5 + $0xc0] sm:$0xff]
    %v805 = vld [vmem:[#allocation5 + $0xc8] sm:$0xff]
    %v806 = vld [vmem:[#allocation5 + $0xd0] sm:$0xff]
    %v807 = vld [vmem:[#allocation5 + $0xd8] sm:$0xff]
    %v808 = vld [vmem:[#allocation5 + $0xe0] sm:$0xff]
    %v809 = vld [vmem:[#allocation5 + $0xe8] sm:$0xff]
    %v810 = vld [vmem:[#allocation5 + $0xf0] sm:$0xff]
    %v811 = vld [vmem:[#allocation5 + $0xf8] sm:$0xff]
    %v812 = vld [vmem:[%s6] sm:$0x3]
    %v814 = vperm.slane %v812, 0
    %v815 = vperm.slane %v812, 1
    %818 = vmatpush.msra.mxu0 %v810
    %819 = vmatpush.msra.mxu0 %v808
    %820 = vmatpush.msra.mxu0 %v806
    %821 = vmatpush.msra.mxu0 %v804
    %822 = vmatpush.msra.mxu0 %v802
    %823 = vmatpush.msra.mxu0 %v800
    %824 = vmatpush.msra.mxu0 %v798
    %825 = vmatpush.msra.mxu0 %v796
    %826 = vmatpush.msra.mxu0 %v794
    %827 = vmatpush.msra.mxu0 %v792
    %828 = vmatpush.msra.mxu0 %v790
    %829 = vmatpush.msra.mxu0 %v788
    %830 = vmatpush.msra.mxu0 %v786
    %831 = vmatpush.msra.mxu0 %v784
    %832 = vmatpush.msra.mxu0 %v782
    %833 = vmatpush.msra.mxu0 %v780
    %834 = vmatmul.f32.gmra.mxu0 %v764
    %v835 = vpop.f32.mrf.mxu0
    %v836 = vadd.f32 %v814, %v835
    %837 = vmatmul.f32.gmra.mxu0 %v765
    %v838 = vpop.f32.mrf.mxu0
    %v839 = vadd.f32 %v814, %v838
    %840 = vmatmul.f32.gmra.mxu0 %v766
    %v841 = vpop.f32.mrf.mxu0
    %v842 = vadd.f32 %v814, %v841
    %843 = vmatmul.f32.gmra.mxu0 %v767
    %v844 = vpop.f32.mrf.mxu0
    %v845 = vadd.f32 %v814, %v844
    %846 = vmatmul.f32.gmra.mxu0 %v768
    %v847 = vpop.f32.mrf.mxu0
    %v848 = vadd.f32 %v814, %v847
    %849 = vmatmul.f32.gmra.mxu0 %v769
    %v850 = vpop.f32.mrf.mxu0
    %v851 = vadd.f32 %v814, %v850
    %852 = vmatmul.f32.gmra.mxu0 %v770
    %v853 = vpop.f32.mrf.mxu0
    %v854 = vadd.f32 %v814, %v853
    %855 = vmatmul.f32.gmra.mxu0 %v771
    %v856 = vpop.f32.mrf.mxu0
    %v857 = vadd.f32 %v814, %v856
    %858 = vmatmul.f32.gmra.mxu0 %v772
    %v859 = vpop.f32.mrf.mxu0
    %v860 = vadd.f32 %v814, %v859
    %861 = vmatmul.f32.gmra.mxu0 %v773
    %v862 = vpop.f32.mrf.mxu0
    %v863 = vadd.f32 %v814, %v862
    %864 = vmatmul.f32.gmra.mxu0 %v774
    %v865 = vpop.f32.mrf.mxu0
    %v866 = vadd.f32 %v814, %v865
    %867 = vmatmul.f32.gmra.mxu0 %v775
    %v868 = vpop.f32.mrf.mxu0
    %v869 = vadd.f32 %v814, %v868
    %870 = vmatmul.f32.gmra.mxu0 %v776
    %v871 = vpop.f32.mrf.mxu0
    %v872 = vadd.f32 %v814, %v871
    %873 = vmatmul.f32.gmra.mxu0 %v777
    %v874 = vpop.f32.mrf.mxu0
    %v875 = vadd.f32 %v814, %v874
    %876 = vmatmul.f32.gmra.mxu0 %v778
    %v877 = vpop.f32.mrf.mxu0
    %v878 = vadd.f32 %v814, %v877
    %879 = vmatmul.f32.gmra.mxu0 %v779
    %v880 = vpop.f32.mrf.mxu0
    %v881 = vadd.f32 %v814, %v880
    %882 = vdwg.mxu0
    %883 = vmatpush.msra.mxu0 %v811
    %884 = vmatpush.msra.mxu0 %v809
    %885 = vmatpush.msra.mxu0 %v807
    %886 = vmatpush.msra.mxu0 %v805
    %887 = vmatpush.msra.mxu0 %v803
    %888 = vmatpush.msra.mxu0 %v801
    %889 = vmatpush.msra.mxu0 %v799
    %890 = vmatpush.msra.mxu0 %v797
    %891 = vmatpush.msra.mxu0 %v795
    %892 = vmatpush.msra.mxu0 %v793
    %893 = vmatpush.msra.mxu0 %v791
    %894 = vmatpush.msra.mxu0 %v789
    %895 = vmatpush.msra.mxu0 %v787
    %896 = vmatpush.msra.mxu0 %v785
    %897 = vmatpush.msra.mxu0 %v783
    %898 = vmatpush.msra.mxu0 %v781
    %899 = vmatmul.f32.gmra.mxu0 %v764
    %v900 = vpop.f32.mrf.mxu0
    %v901 = vadd.f32 %v815, %v900
    %902 = vmatmul.f32.gmra.mxu0 %v765
    %v903 = vpop.f32.mrf.mxu0
    %v904 = vadd.f32 %v815, %v903
    %905 = vmatmul.f32.gmra.mxu0 %v766
    %v906 = vpop.f32.mrf.mxu0
    %v907 = vadd.f32 %v815, %v906
    %908 = vmatmul.f32.gmra.mxu0 %v767
    %v909 = vpop.f32.mrf.mxu0
    %v910 = vadd.f32 %v815, %v909
    %911 = vmatmul.f32.gmra.mxu0 %v768
    %v912 = vpop.f32.mrf.mxu0
    %v913 = vadd.f32 %v815, %v912
    %914 = vmatmul.f32.gmra.mxu0 %v769
    %v915 = vpop.f32.mrf.mxu0
    %v916 = vadd.f32 %v815, %v915
    %917 = vmatmul.f32.gmra.mxu0 %v770
    %v918 = vpop.f32.mrf.mxu0
    %v919 = vadd.f32 %v815, %v918
    %920 = vmatmul.f32.gmra.mxu0 %v771
    %v921 = vpop.f32.mrf.mxu0
    %v922 = vadd.f32 %v815, %v921
    %923 = vmatmul.f32.gmra.mxu0 %v772
    %v924 = vpop.f32.mrf.mxu0
    %v925 = vadd.f32 %v815, %v924
    %926 = vmatmul.f32.gmra.mxu0 %v773
    %v927 = vpop.f32.mrf.mxu0
    %v928 = vadd.f32 %v815, %v927
    %929 = vmatmul.f32.gmra.mxu0 %v774
    %v930 = vpop.f32.mrf.mxu0
    %v931 = vadd.f32 %v815, %v930
    %932 = vmatmul.f32.gmra.mxu0 %v775
    %v933 = vpop.f32.mrf.mxu0
    %v934 = vadd.f32 %v815, %v933
    %935 = vmatmul.f32.gmra.mxu0 %v776
    %v936 = vpop.f32.mrf.mxu0
    %v937 = vadd.f32 %v815, %v936
    %938 = vmatmul.f32.gmra.mxu0 %v777
    %v939 = vpop.f32.mrf.mxu0
    %v940 = vadd.f32 %v815, %v939
    %941 = vmatmul.f32.gmra.mxu0 %v778
    %v942 = vpop.f32.mrf.mxu0
    %v943 = vadd.f32 %v815, %v942
    %944 = vmatmul.f32.gmra.mxu0 %v779
    %v945 = vpop.f32.mrf.mxu0
    %v946 = vadd.f32 %v815, %v945
    %947 = vdwg.mxu0
    %vm948 = vcmp.ge.f32.partialorder %v836, 0.0
    %vm949 = vcmp.ge.f32.partialorder %v839, 0.0
    %vm950 = vcmp.ge.f32.partialorder %v842, 0.0
    %vm951 = vcmp.ge.f32.partialorder %v845, 0.0
    %vm952 = vcmp.ge.f32.partialorder %v848, 0.0
    %vm953 = vcmp.ge.f32.partialorder %v851, 0.0
    %vm954 = vcmp.ge.f32.partialorder %v854, 0.0
    %vm955 = vcmp.ge.f32.partialorder %v857, 0.0
    %vm956 = vcmp.ge.f32.partialorder %v860, 0.0
    %vm957 = vcmp.ge.f32.partialorder %v863, 0.0
    %vm958 = vcmp.ge.f32.partialorder %v866, 0.0
    %vm959 = vcmp.ge.f32.partialorder %v869, 0.0
    %vm960 = vcmp.ge.f32.partialorder %v872, 0.0
    %vm961 = vcmp.ge.f32.partialorder %v875, 0.0
    %vm962 = vcmp.ge.f32.partialorder %v878, 0.0
    %vm963 = vcmp.ge.f32.partialorder %v881, 0.0
    %v964 = vmul.f32 %v836, 0.1
    %v965 = vmul.f32 %v839, 0.1
    %v966 = vmul.f32 %v842, 0.1
    %v967 = vmul.f32 %v845, 0.1
    %v968 = vmul.f32 %v848, 0.1
    %v969 = vmul.f32 %v851, 0.1
    %v970 = vmul.f32 %v854, 0.1
    %v971 = vmul.f32 %v857, 0.1
    %v972 = vmul.f32 %v860, 0.1
    %v973 = vmul.f32 %v863, 0.1
    %v974 = vmul.f32 %v866, 0.1
    %v975 = vmul.f32 %v869, 0.1
    %v976 = vmul.f32 %v872, 0.1
    %v977 = vmul.f32 %v875, 0.1
    %v978 = vmul.f32 %v878, 0.1
    %v979 = vmul.f32 %v881, 0.1
    %v980 = vsel %vm948, %v836, %v964
    %v981 = vsel %vm949, %v839, %v965
    %v982 = vsel %vm950, %v842, %v966
    %v983 = vsel %vm951, %v845, %v967
    %v984 = vsel %vm952, %v848, %v968
    %v985 = vsel %vm953, %v851, %v969
    %v986 = vsel %vm954, %v854, %v970
    %v987 = vsel %vm955, %v857, %v971
    %v988 = vsel %vm956, %v860, %v972
    %v989 = vsel %vm957, %v863, %v973
    %v990 = vsel %vm958, %v866, %v974
    %v991 = vsel %vm959, %v869, %v975
    %v992 = vsel %vm960, %v872, %v976
    %v993 = vsel %vm961, %v875, %v977
    %v994 = vsel %vm962, %v878, %v978
    %v995 = vsel %vm963, %v881, %v979
    %v996 = vadd.f32 %v980, %v901
    %v997 = vadd.f32 %v981, %v904
    %v998 = vadd.f32 %v982, %v907
    %v999 = vadd.f32 %v983, %v910
    %v1000 = vadd.f32 %v984, %v913
    %v1001 = vadd.f32 %v985, %v916
    %v1002 = vadd.f32 %v986, %v919
    %v1003 = vadd.f32 %v987, %v922
    %v1004 = vadd.f32 %v988, %v925
    %v1005 = vadd.f32 %v989, %v928
    %v1006 = vadd.f32 %v990, %v931
    %v1007 = vadd.f32 %v991, %v934
    %v1008 = vadd.f32 %v992, %v937
    %v1009 = vadd.f32 %v993, %v940
    %v1010 = vadd.f32 %v994, %v943
    %v1011 = vadd.f32 %v995, %v946
    %v1012 = vld [vmem:[#allocation7] sm:$0xff]
    %v1013 = vld [vmem:[#allocation7 + $0x8] sm:$0xff]
    %v1014 = vld [vmem:[#allocation7 + $0x10] sm:$0xff]
    %v1015 = vld [vmem:[#allocation7 + $0x18] sm:$0xff]
    %v1016 = vld [vmem:[#allocation7 + $0x20] sm:$0xff]
    %v1017 = vld [vmem:[#allocation7 + $0x28] sm:$0xff]
    %v1018 = vld [vmem:[#allocation7 + $0x30] sm:$0xff]
    %v1019 = vld [vmem:[#allocation7 + $0x38] sm:$0xff]
    %v1020 = vld [vmem:[#allocation7 + $0x40] sm:$0xff]
    %v1021 = vld [vmem:[#allocation7 + $0x48] sm:$0xff]
    %v1022 = vld [vmem:[#allocation7 + $0x50] sm:$0xff]
    %v1023 = vld [vmem:[#allocation7 + $0x58] sm:$0xff]
    %v1024 = vld [vmem:[#allocation7 + $0x60] sm:$0xff]
    %v1025 = vld [vmem:[#allocation7 + $0x68] sm:$0xff]
    %v1026 = vld [vmem:[#allocation7 + $0x70] sm:$0xff]
    %v1027 = vld [vmem:[#allocation7 + $0x78] sm:$0xff]
    %v1028 = vld [vmem:[#allocation7 + $0x80] sm:$0xff]
    %v1029 = vld [vmem:[#allocation7 + $0x88] sm:$0xff]
    %v1030 = vld [vmem:[#allocation7 + $0x90] sm:$0xff]
    %v1031 = vld [vmem:[#allocation7 + $0x98] sm:$0xff]
    %v1032 = vld [vmem:[#allocation7 + $0xa0] sm:$0xff]
    %v1033 = vld [vmem:[#allocation7 + $0xa8] sm:$0xff]
    %v1034 = vld [vmem:[#allocation7 + $0xb0] sm:$0xff]
    %v1035 = vld [vmem:[#allocation7 + $0xb8] sm:$0xff]
    %v1036 = vld [vmem:[#allocation7 + $0xc0] sm:$0xff]
    %v1037 = vld [vmem:[#allocation7 + $0xc8] sm:$0xff]
    %v1038 = vld [vmem:[#allocation7 + $0xd0] sm:$0xff]
    %v1039 = vld [vmem:[#allocation7 + $0xd8] sm:$0xff]
    %v1040 = vld [vmem:[#allocation7 + $0xe0] sm:$0xff]
    %v1041 = vld [vmem:[#allocation7 + $0xe8] sm:$0xff]
    %v1042 = vld [vmem:[#allocation7 + $0xf0] sm:$0xff]
    %v1043 = vld [vmem:[#allocation7 + $0xf8] sm:$0xff]
    %v1044 = vld [vmem:[%s8] sm:$0x3]
    %v1046 = vperm.slane %v1044, 0
    %v1047 = vperm.slane %v1044, 1
    %1050 = vmatpush.msra.mxu0 %v1042
    %1051 = vmatpush.msra.mxu0 %v1040
    %1052 = vmatpush.msra.mxu0 %v1038
    %1053 = vmatpush.msra.mxu0 %v1036
    %1054 = vmatpush.msra.mxu0 %v1034
    %1055 = vmatpush.msra.mxu0 %v1032
    %1056 = vmatpush.msra.mxu0 %v1030
    %1057 = vmatpush.msra.mxu0 %v1028
    %1058 = vmatpush.msra.mxu0 %v1026
    %1059 = vmatpush.msra.mxu0 %v1024
    %1060 = vmatpush.msra.mxu0 %v1022
    %1061 = vmatpush.msra.mxu0 %v1020
    %1062 = vmatpush.msra.mxu0 %v1018
    %1063 = vmatpush.msra.mxu0 %v1016
    %1064 = vmatpush.msra.mxu0 %v1014
    %1065 = vmatpush.msra.mxu0 %v1012
    %1066 = vmatmul.f32.gmra.mxu0 %v996
    %v1067 = vpop.f32.mrf.mxu0
    %v1068 = vadd.f32 %v1046, %v1067
    %1069 = vmatmul.f32.gmra.mxu0 %v997
    %v1070 = vpop.f32.mrf.mxu0
    %v1071 = vadd.f32 %v1046, %v1070
    %1072 = vmatmul.f32.gmra.mxu0 %v998
    %v1073 = vpop.f32.mrf.mxu0
    %v1074 = vadd.f32 %v1046, %v1073
    %1075 = vmatmul.f32.gmra.mxu0 %v999
    %v1076 = vpop.f32.mrf.mxu0
    %v1077 = vadd.f32 %v1046, %v1076
    %1078 = vmatmul.f32.gmra.mxu0 %v1000
    %v1079 = vpop.f32.mrf.mxu0
    %v1080 = vadd.f32 %v1046, %v1079
    %1081 = vmatmul.f32.gmra.mxu0 %v1001
    %v1082 = vpop.f32.mrf.mxu0
    %v1083 = vadd.f32 %v1046, %v1082
    %1084 = vmatmul.f32.gmra.mxu0 %v1002
    %v1085 = vpop.f32.mrf.mxu0
    %v1086 = vadd.f32 %v1046, %v1085
    %1087 = vmatmul.f32.gmra.mxu0 %v1003
    %v1088 = vpop.f32.mrf.mxu0
    %v1089 = vadd.f32 %v1046, %v1088
    %1090 = vmatmul.f32.gmra.mxu0 %v1004
    %v1091 = vpop.f32.mrf.mxu0
    %v1092 = vadd.f32 %v1046, %v1091
    %1093 = vmatmul.f32.gmra.mxu0 %v1005
    %v1094 = vpop.f32.mrf.mxu0
    %v1095 = vadd.f32 %v1046, %v1094
    %1096 = vmatmul.f32.gmra.mxu0 %v1006
    %v1097 = vpop.f32.mrf.mxu0
    %v1098 = vadd.f32 %v1046, %v1097
    %1099 = vmatmul.f32.gmra.mxu0 %v1007
    %v1100 = vpop.f32.mrf.mxu0
    %v1101 = vadd.f32 %v1046, %v1100
    %1102 = vmatmul.f32.gmra.mxu0 %v1008
    %v1103 = vpop.f32.mrf.mxu0
    %v1104 = vadd.f32 %v1046, %v1103
    %1105 = vmatmul.f32.gmra.mxu0 %v1009
    %v1106 = vpop.f32.mrf.mxu0
    %v1107 = vadd.f32 %v1046, %v1106
    %1108 = vmatmul.f32.gmra.mxu0 %v1010
    %v1109 = vpop.f32.mrf.mxu0
    %v1110 = vadd.f32 %v1046, %v1109
    %1111 = vmatmul.f32.gmra.mxu0 %v1011
    %v1112 = vpop.f32.mrf.mxu0
    %v1113 = vadd.f32 %v1046, %v1112
    %1114 = vdwg.mxu0
    %1115 = vmatpush.msra.mxu0 %v1043
    %1116 = vmatpush.msra.mxu0 %v1041
    %1117 = vmatpush.msra.mxu0 %v1039
    %1118 = vmatpush.msra.mxu0 %v1037
    %1119 = vmatpush.msra.mxu0 %v1035
    %1120 = vmatpush.msra.mxu0 %v1033
    %1121 = vmatpush.msra.mxu0 %v1031
    %1122 = vmatpush.msra.mxu0 %v1029
    %1123 = vmatpush.msra.mxu0 %v1027
    %1124 = vmatpush.msra.mxu0 %v1025
    %1125 = vmatpush.msra.mxu0 %v1023
    %1126 = vmatpush.msra.mxu0 %v1021
    %1127 = vmatpush.msra.mxu0 %v1019
    %1128 = vmatpush.msra.mxu0 %v1017
    %1129 = vmatpush.msra.mxu0 %v1015
    %1130 = vmatpush.msra.mxu0 %v1013
    %1131 = vmatmul.f32.gmra.mxu0 %v996
    %v1132 = vpop.f32.mrf.mxu0
    %v1133 = vadd.f32 %v1047, %v1132
    %1134 = vmatmul.f32.gmra.mxu0 %v997
    %v1135 = vpop.f32.mrf.mxu0
    %v1136 = vadd.f32 %v1047, %v1135
    %1137 = vmatmul.f32.gmra.mxu0 %v998
    %v1138 = vpop.f32.mrf.mxu0
    %v1139 = vadd.f32 %v1047, %v1138
    %1140 = vmatmul.f32.gmra.mxu0 %v999
    %v1141 = vpop.f32.mrf.mxu0
    %v1142 = vadd.f32 %v1047, %v1141
    %1143 = vmatmul.f32.gmra.mxu0 %v1000
    %v1144 = vpop.f32.mrf.mxu0
    %v1145 = vadd.f32 %v1047, %v1144
    %1146 = vmatmul.f32.gmra.mxu0 %v1001
    %v1147 = vpop.f32.mrf.mxu0
    %v1148 = vadd.f32 %v1047, %v1147
    %1149 = vmatmul.f32.gmra.mxu0 %v1002
    %v1150 = vpop.f32.mrf.mxu0
    %v1151 = vadd.f32 %v1047, %v1150
    %1152 = vmatmul.f32.gmra.mxu0 %v1003
    %v1153 = vpop.f32.mrf.mxu0
    %v1154 = vadd.f32 %v1047, %v1153
    %1155 = vmatmul.f32.gmra.mxu0 %v1004
    %v1156 = vpop.f32.mrf.mxu0
    %v1157 = vadd.f32 %v1047, %v1156
    %1158 = vmatmul.f32.gmra.mxu0 %v1005
    %v1159 = vpop.f32.mrf.mxu0
    %v1160 = vadd.f32 %v1047, %v1159
    %1161 = vmatmul.f32.gmra.mxu0 %v1006
    %v1162 = vpop.f32.mrf.mxu0
    %v1163 = vadd.f32 %v1047, %v1162
    %1164 = vmatmul.f32.gmra.mxu0 %v1007
    %v1165 = vpop.f32.mrf.mxu0
    %v1166 = vadd.f32 %v1047, %v1165
    %1167 = vmatmul.f32.gmra.mxu0 %v1008
    %v1168 = vpop.f32.mrf.mxu0
    %v1169 = vadd.f32 %v1047, %v1168
    %1170 = vmatmul.f32.gmra.mxu0 %v1009
    %v1171 = vpop.f32.mrf.mxu0
    %v1172 = vadd.f32 %v1047, %v1171
    %1173 = vmatmul.f32.gmra.mxu0 %v1010
    %v1174 = vpop.f32.mrf.mxu0
    %v1175 = vadd.f32 %v1047, %v1174
    %1176 = vmatmul.f32.gmra.mxu0 %v1011
    %v1177 = vpop.f32.mrf.mxu0
    %v1178 = vadd.f32 %v1047, %v1177
    %1179 = vdwg.mxu0
    %vm1180 = vcmp.ge.f32.partialorder %v1068, 0.0
    %vm1181 = vcmp.ge.f32.partialorder %v1071, 0.0
    %vm1182 = vcmp.ge.f32.partialorder %v1074, 0.0
    %vm1183 = vcmp.ge.f32.partialorder %v1077, 0.0
    %vm1184 = vcmp.ge.f32.partialorder %v1080, 0.0
    %vm1185 = vcmp.ge.f32.partialorder %v1083, 0.0
    %vm1186 = vcmp.ge.f32.partialorder %v1086, 0.0
    %vm1187 = vcmp.ge.f32.partialorder %v1089, 0.0
    %vm1188 = vcmp.ge.f32.partialorder %v1092, 0.0
    %vm1189 = vcmp.ge.f32.partialorder %v1095, 0.0
    %vm1190 = vcmp.ge.f32.partialorder %v1098, 0.0
    %vm1191 = vcmp.ge.f32.partialorder %v1101, 0.0
    %vm1192 = vcmp.ge.f32.partialorder %v1104, 0.0
    %vm1193 = vcmp.ge.f32.partialorder %v1107, 0.0
    %vm1194 = vcmp.ge.f32.partialorder %v1110, 0.0
    %vm1195 = vcmp.ge.f32.partialorder %v1113, 0.0
    %v1196 = vmul.f32 %v1068, 0.1
    %v1197 = vmul.f32 %v1071, 0.1
    %v1198 = vmul.f32 %v1074, 0.1
    %v1199 = vmul.f32 %v1077, 0.1
    %v1200 = vmul.f32 %v1080, 0.1
    %v1201 = vmul.f32 %v1083, 0.1
    %v1202 = vmul.f32 %v1086, 0.1
    %v1203 = vmul.f32 %v1089, 0.1
    %v1204 = vmul.f32 %v1092, 0.1
    %v1205 = vmul.f32 %v1095, 0.1
    %v1206 = vmul.f32 %v1098, 0.1
    %v1207 = vmul.f32 %v1101, 0.1
    %v1208 = vmul.f32 %v1104, 0.1
    %v1209 = vmul.f32 %v1107, 0.1
    %v1210 = vmul.f32 %v1110, 0.1
    %v1211 = vmul.f32 %v1113, 0.1
    %v1212 = vsel %vm1180, %v1068, %v1196
    %v1213 = vsel %vm1181, %v1071, %v1197
    %v1214 = vsel %vm1182, %v1074, %v1198
    %v1215 = vsel %vm1183, %v1077, %v1199
    %v1216 = vsel %vm1184, %v1080, %v1200
    %v1217 = vsel %vm1185, %v1083, %v1201
    %v1218 = vsel %vm1186, %v1086, %v1202
    %v1219 = vsel %vm1187, %v1089, %v1203
    %v1220 = vsel %vm1188, %v1092, %v1204
    %v1221 = vsel %vm1189, %v1095, %v1205
    %v1222 = vsel %vm1190, %v1098, %v1206
    %v1223 = vsel %vm1191, %v1101, %v1207
    %v1224 = vsel %vm1192, %v1104, %v1208
    %v1225 = vsel %vm1193, %v1107, %v1209
    %v1226 = vsel %vm1194, %v1110, %v1210
    %v1227 = vsel %vm1195, %v1113, %v1211
    %v1228 = vadd.f32 %v1212, %v1133
    %v1229 = vadd.f32 %v1213, %v1136
    %v1230 = vadd.f32 %v1214, %v1139
    %v1231 = vadd.f32 %v1215, %v1142
    %v1232 = vadd.f32 %v1216, %v1145
    %v1233 = vadd.f32 %v1217, %v1148
    %v1234 = vadd.f32 %v1218, %v1151
    %v1235 = vadd.f32 %v1219, %v1154
    %v1236 = vadd.f32 %v1220, %v1157
    %v1237 = vadd.f32 %v1221, %v1160
    %v1238 = vadd.f32 %v1222, %v1163
    %v1239 = vadd.f32 %v1223, %v1166
    %v1240 = vadd.f32 %v1224, %v1169
    %v1241 = vadd.f32 %v1225, %v1172
    %v1242 = vadd.f32 %v1226, %v1175
    %v1243 = vadd.f32 %v1227, %v1178
    %v1244 = vld [vmem:[%s9] sm:$0xff]
    %1245 = vmatpush.xpose.msra.mxu0 %v1243
    %1246 = vmatpush.xpose.msra.mxu0 %v1242
    %1247 = vmatpush.xpose.msra.mxu0 %v1241
    %1248 = vmatpush.xpose.msra.mxu0 %v1240
    %1249 = vmatpush.xpose.msra.mxu0 %v1239
    %1250 = vmatpush.xpose.msra.mxu0 %v1238
    %1251 = vmatpush.xpose.msra.mxu0 %v1237
    %1252 = vmatpush.xpose.msra.mxu0 %v1236
    %1253 = vmatpush.xpose.msra.mxu0 %v1235
    %1254 = vmatpush.xpose.msra.mxu0 %v1234
    %1255 = vmatpush.xpose.msra.mxu0 %v1233
    %1256 = vmatpush.xpose.msra.mxu0 %v1232
    %1257 = vmatpush.xpose.msra.mxu0 %v1231
    %1258 = vmatpush.xpose.msra.mxu0 %v1230
    %1259 = vmatpush.xpose.msra.mxu0 %v1229
    %1260 = vmatpush.xpose.msra.mxu0 %v1228
    %1261 = vmatmul.f32.gmra.mxu0 %v1244
    %v1262 = vpop.f32.mrf.mxu0
    %v1263 = vadd.f32 0.0, %v1262
    %1264 = vdwg.mxu0
    %v1265 = vld [vmem:[#allocation2] sm:$0x1]
    %1267 = vset.pattern.permute.xlu0 0
    %1268 = vperm.xlu0 %1267, %v1265
    %v1269 = vpop.permute.xlu0 %1268
    %v1271 = vperm.slane %v1269, 0
    %v1272 = vadd.f32 %v1263, %v1271
    %v1273 = vxor.u32 %v1272, 2147483648
    %v1274 = vmul.f32 %v1273, 1.442695
    %v1275 = vpow.pop %v1274
    %v1276 = vadd.f32 %v1275, 1.0
    %v1277 = vrcp.pop %v1276
    %v1278 = vmul.f32 %v1276, %v1277
    %v1279 = vsub.f32 1.0, %v1278
    %v1280 = vmul.f32 %v1277, %v1279
    %v1281 = vadd.f32 %v1277, %v1280
    %vm1282 = vweird.f32 %v1276
    %vm1283 = vweird.f32 %v1277
    %vm1284 = vmor %vm1282, %vm1283
    %v1285 = vsel %vm1284, %v1277, %v1281
    %v1286 = vand.u32 2147483647, %v1276
    %vm1287 = vcmp.eq.f32.partialorder %v1286, 8.507059e+37
    %v1288 = vand.u32 %v1276, 2147483648
    %v1289 = vor.u32 1.1754944e-38, %v1288
    %v1290 = vsel %vm1287, %v1289, %v1285
    %v1291 = vmul.f32 1.0, %v1290
    %1292 = vst [vmem:[%s11] sm:$0x1] %v1291
    // Predicated region
    $region58: #{improved_diabetes_net_forward.1} parent=1 // pred_check
      _
    $region59: #{improved_diabetes_net_forward.1} parent=1 // pred_check_branch
      %1294 = sbr.rel (0) target = $region61
    $region60: #{improved_diabetes_net_forward.1} parent=1 // pred_region
      _
    $region61: #{improved_diabetes_net_forward.1} parent=1 // pred_fallthru
      _
    // Predicated region
    $region62: #{improved_diabetes_net_forward.1} parent=1 // pred_check
      _
    $region63: #{improved_diabetes_net_forward.1} parent=1 // pred_check_branch
      %1296 = sbr.rel (0) target = $region65
    $region64: #{improved_diabetes_net_forward.1} parent=1 // pred_region
      _
    $region65: #{improved_diabetes_net_forward.1} parent=1 // pred_fallthru
      _
    %1297 = vsyncpa [#allocation4], 1
    %1298 = vsyncpa [#allocation6], 1

</llo_original>
